<compile_context>
chip_gen: v7x
topology: tpu7x:2x2x1
jax: 0.10.0
libtpu: 0.0.40
codegen_flags: <defaults>
</compile_context>

<pallas_src>
import jax
import jax.numpy as jnp
from jax.experimental import pallas as pl
from jax.experimental.pallas import tpu as pltpu


def _pick_tile_h(hout, wout, per_row_bytes, target_rows=2048,
                 row_budget_bytes=24 * 1024 * 1024):
    """Largest divisor d of hout with (d*wout) % 8 == 0, d*wout <= target_rows
    and row-proportional VMEM within budget.  Falls back to the full image
    height, which is always a legal block (it spans the full row axis of the
    (N, Hout*Wout, Opad) output)."""
    best = None
    for d in range(1, hout + 1):
        if hout % d:
            continue
        rows = d * wout
        if rows % 8 or rows > target_rows or rows * per_row_bytes > row_budget_bytes:
            continue
        best = d
    return best if best is not None else hout


def _make_kernel(KH, KW, Wout, tile_h, C, Kc, Opad):
    rows = tile_h * Wout

    def kernel(x_ref, w_ref, b_ref, o_ref, patch_ref):
        # x_ref:     (1, Hp, Wp, C)      bf16, whole padded image of batch n
        # w_ref:     (Kc, Opad)          bf16, im2col weight matrix
        # b_ref:     (1, Opad)           f32
        # o_ref:     (1, rows, Opad)     out dtype, lane-dense output tile
        # patch_ref: (tile_h, Wout, Kc)  bf16 scratch, in-VMEM im2col slab
        h0 = pl.multiple_of(pl.program_id(1) * tile_h, tile_h)

        # Stage the KH*KW shifted views once per tile (no per-tap matmul, no
        # repeated f32 accumulator adds).
        for kh in range(KH):
            x_kh = x_ref[0, pl.ds(h0 + kh, tile_h), :, :]          # (tile_h, Wp, C)
            for kw in range(KW):
                t = kh * KW + kw
                patch_ref[:, :, t * C:(t + 1) * C] = x_kh[:, kw:kw + Wout, :]

        # One deep-K MXU matmul: (rows, Kc) @ (Kc, Opad) -> f32.
        patch = patch_ref[...].reshape(rows, Kc)
        acc = jnp.dot(patch, w_ref[...], preferred_element_type=jnp.float32)
        acc = acc + b_ref[...]                                     # bias (broadcast)
        o_ref[0] = jnp.maximum(acc, 0.0).astype(o_ref.dtype)       # ReLU, one store

    return kernel


def conv2d_relu(x_nchw, weight, bias, *, stride=1, out_dtype=jnp.float32,
                nhwc_out=False):
    """nn.Conv2d(in, out, k, stride, (k-1)//2) followed by ReLU.

    x_nchw: (N, C, H, W) f32, weight: (O, C, KH, KW) f32, bias: (O,) f32.
    Returns (N, O, Hout, Wout) by default (PyTorch NCHW semantics), or NHWC
    when nhwc_out=True (skips one HBM round-trip of the activations).
    """
    N, C, H, W = x_nchw.shape
    O, Cw, KH, KW = weight.shape
    assert Cw == C
    pad = (KH - 1) // 2

    if stride != 1:
        # TODO(synk): implement stride > 1 inside the kernel (strided output
        # rows) instead of computing the stride-1 conv and subsampling here.
        full = conv2d_relu(x_nchw, weight, bias, stride=1,
                           out_dtype=out_dtype, nhwc_out=nhwc_out)
        Hout = (H + 2 * pad - KH) // stride + 1
        Wout = (W + 2 * pad - KW) // stride + 1
        if nhwc_out:
            return full[:, ::stride, ::stride, :][:, :Hout, :Wout, :]
        return full[:, :, ::stride, ::stride][:, :, :Hout, :Wout]

    Hout = H + 2 * pad - KH + 1
    Wout = W + 2 * pad - KW + 1
    Hp, Wp = H + 2 * pad, W + 2 * pad

    Kc = KH * KW * C
    # Lane-dense output channels; no-op slice later when O % 128 == 0.
    Opad = max(128, ((O + 127) // 128) * 128)
    out_bytes = jnp.dtype(out_dtype).itemsize

    # Row-proportional VMEM per grid step: double-buffered output tile plus
    # im2col staging slab.
    per_row_bytes = 2 * Opad * out_bytes + Kc * 2
    tile_h = _pick_tile_h(Hout, Wout, per_row_bytes)
    n_h = Hout // tile_h
    rows = tile_h * Wout

    # NHWC, spatially zero-padded, bf16 activations (halves HBM read traffic,
    # native MXU dtype); accumulation stays f32 in the kernel.
    x = jnp.transpose(x_nchw, (0, 2, 3, 1))
    xp = jnp.pad(x, ((0, 0), (pad, pad), (pad, pad), (0, 0))).astype(jnp.bfloat16)

    # im2col weight matrix: W2[(kh*KW + kw)*C + c, o] = weight[o, c, kh, kw],
    # output channels zero-padded to Opad (lane-dense); bias kept f32.
    w2 = jnp.transpose(weight, (2, 3, 1, 0)).reshape(Kc, O)
    w2 = jnp.pad(w2, ((0, 0), (0, Opad - O))).astype(jnp.bfloat16)
    b2 = jnp.pad(bias.reshape(1, O), ((0, 0), (0, Opad - O))).astype(jnp.float32)

    kernel = _make_kernel(KH, KW, Wout, tile_h, C, Kc, Opad)

    # VMEM footprint computed from the actual tile (v7x has only 64 MiB
    # physical VMEM per TC, so no hard-coded large limit).
    vmem_need = (
        2 * Hp * Wp * C * 2            # padded image, bf16, double-buffered
        + 2 * Kc * Opad * 2            # weights, double-buffered
        + 2 * Opad * 4                 # bias
        + 2 * rows * Opad * out_bytes  # output tile, double-buffered
        + tile_h * Wout * Kc * 2       # im2col staging scratch
    )
    vmem_limit = int(min(max(vmem_need + (4 << 20), 16 << 20), 120 << 20))

    out = pl.pallas_call(
        kernel,
        out_shape=jax.ShapeDtypeStruct((N, Hout * Wout, Opad), out_dtype),
        grid_spec=pltpu.PrefetchScalarGridSpec(
            num_scalar_prefetch=0,
            grid=(N, n_h),
            in_specs=[
                # Whole padded image of batch n; constant block index across
                # the h axis, so each image is DMA'd to VMEM once per batch.
                pl.BlockSpec((1, Hp, Wp, C), lambda n, h: (n, 0, 0, 0)),
                # Weights / bias resident (constant index).
                pl.BlockSpec((Kc, Opad), lambda n, h: (0, 0)),
                pl.BlockSpec((1, Opad), lambda n, h: (0, 0)),
            ],
            out_specs=pl.BlockSpec((1, rows, Opad), lambda n, h: (n, h, 0)),
            scratch_shapes=[pltpu.VMEM((tile_h, Wout, Kc), jnp.bfloat16)],
        ),
        compiler_params=pltpu.CompilerParams(
            dimension_semantics=("parallel", "parallel"),
            vmem_limit_bytes=vmem_limit),
    )(xp, w2, b2)

    out = out.reshape(N, Hout, Wout, Opad)[..., :O]
    if nhwc_out:
        return out
    return jnp.transpose(out, (0, 3, 1, 2))


if __name__ == "__main__":
    # Module hyper-params (defaults: kernel_size=3, strides=1, activation='relu')
    N, C_in, C_out, H, W, ksize = 2, 4, 8, 16, 16, 3

    key = jax.random.PRNGKey(0)
    kx, kwt, kb = jax.random.split(key, 3)

    x = jax.random.normal(kx, (N, C_in, H, W), dtype=jnp.float32)

    # kaiming_normal_ (fan_in mode, relu gain): std = sqrt(2 / fan_in)
    fan_in = C_in * ksize * ksize
    weight = jax.random.normal(kwt, (C_out, C_in, ksize, ksize),
                               dtype=jnp.float32) * jnp.sqrt(2.0 / fan_in)
    # PyTorch default conv bias init: U(-1/sqrt(fan_in), 1/sqrt(fan_in))
    bound = 1.0 / jnp.sqrt(fan_in)
    bias = jax.random.uniform(kb, (C_out,), dtype=jnp.float32,
                              minval=-bound, maxval=bound)

    y = conv2d_relu(x, weight, bias, stride=1)
    y = jax.block_until_ready(y)

    # Correctness check against XLA's conv on the same bf16-quantized operands
    # (bf16 input/weight quantization is the kernel's only deviation from f32
    # math; accumulation is f32 in both paths).
    pad = (ksize - 1) // 2
    xq = x.astype(jnp.bfloat16).astype(jnp.float32)
    wq = weight.astype(jnp.bfloat16).astype(jnp.float32)
    ref = jax.lax.conv_general_dilated(
        xq, wq, window_strides=(1, 1),
        padding=((pad, pad), (pad, pad)),
        dimension_numbers=("NCHW", "OIHW", "NCHW"))
    ref = jnp.maximum(ref + bias[None, :, None, None], 0.0)

    assert y.shape == (N, C_out, H, W), y.shape
    max_err = float(jnp.max(jnp.abs(y - ref)))
    assert jnp.allclose(y, ref, atol=1e-2, rtol=1e-2), max_err
    print("KERNEL_OK")
</pallas_src>

<mosaic_0001>
module attributes {stable_mosaic.version = 11 : i64} {
  func.func @kernel(%arg0: i32, %arg1: i32, %arg2: memref<1x18x18x4xbf16, #tpu.memory_space<vmem>>, %arg3: memref<36x128xbf16, #tpu.memory_space<vmem>>, %arg4: memref<1x128xf32, #tpu.memory_space<vmem>>, %arg5: memref<1x256x128xf32, #tpu.memory_space<vmem>>, %arg6: memref<16x16x36xbf16, #tpu.memory_space<vmem>>) attributes {dimension_semantics = [#tpu.dimension_semantics<parallel>, #tpu.dimension_semantics<parallel>], iteration_bounds = array<i64: 2, 1>, scalar_prefetch = 0 : i64, scratch_operands = 1 : i64, tpu.core_type = #tpu.core_type<tc>, window_params = [{transform_indices = @transform_0, window_bounds = array<i64: 1, 18, 18, 4>}, {pipeline_mode = #tpu.pipeline_mode<synchronous>, transform_indices = @transform_1, window_bounds = array<i64: 36, 128>}, {pipeline_mode = #tpu.pipeline_mode<synchronous>, transform_indices = @transform_2, window_bounds = array<i64: 1, 128>}, {transform_indices = @transform_3, window_bounds = array<i64: 1, 256, 128>}]} {
    %c16_i32 = arith.constant 16 : i32
    %0 = arith.muli %arg1, %c16_i32 : i32
    %1 = tpu.assume_multiple %0, 16 : i32
    %c0_i32 = arith.constant 0 : i32
    %2 = arith.addi %1, %c0_i32 : i32
    %c0 = arith.constant 0 : index
    %3 = arith.index_cast %2 : i32 to index
    %c0_0 = arith.constant 0 : index
    %c0_1 = arith.constant 0 : index
    %4 = vector.load %arg2[%c0, %3, %c0_0, %c0_1] : memref<1x18x18x4xbf16, #tpu.memory_space<vmem>>, vector<1x16x18x4xbf16>
    %5 = vector.shape_cast %4 : vector<1x16x18x4xbf16> to vector<16x18x4xbf16>
    %6 = vector.extract_strided_slice %5 {offsets = [0, 0, 0], sizes = [16, 16, 4], strides = [1, 1, 1]} : vector<16x18x4xbf16> to vector<16x16x4xbf16>
    %c0_2 = arith.constant 0 : index
    %c0_3 = arith.constant 0 : index
    %c0_4 = arith.constant 0 : index
    %7 = vector.load %arg6[%c0_2, %c0_3, %c0_4] : memref<16x16x36xbf16, #tpu.memory_space<vmem>>, vector<16x16x4xbf16>
    tpu.vector_store %arg6[%c0_2, %c0_3, %c0_4], %6 {strides = array<i32>} : memref<16x16x36xbf16, #tpu.memory_space<vmem>>, vector<16x16x4xbf16>,
    %8 = vector.extract_strided_slice %5 {offsets = [0, 1, 0], sizes = [16, 16, 4], strides = [1, 1, 1]} : vector<16x18x4xbf16> to vector<16x16x4xbf16>
    %c0_5 = arith.constant 0 : index
    %c0_6 = arith.constant 0 : index
    %c4 = arith.constant 4 : index
    %9 = vector.load %arg6[%c0_5, %c0_6, %c4] : memref<16x16x36xbf16, #tpu.memory_space<vmem>>, vector<16x16x4xbf16>
    tpu.vector_store %arg6[%c0_5, %c0_6, %c4], %8 {strides = array<i32>} : memref<16x16x36xbf16, #tpu.memory_space<vmem>>, vector<16x16x4xbf16>,
    %10 = vector.extract_strided_slice %5 {offsets = [0, 2, 0], sizes = [16, 16, 4], strides = [1, 1, 1]} : vector<16x18x4xbf16> to vector<16x16x4xbf16>
    %c0_7 = arith.constant 0 : index
    %c0_8 = arith.constant 0 : index
    %c8 = arith.constant 8 : index
    %11 = vector.load %arg6[%c0_7, %c0_8, %c8] : memref<16x16x36xbf16, #tpu.memory_space<vmem>>, vector<16x16x4xbf16>
    tpu.vector_store %arg6[%c0_7, %c0_8, %c8], %10 {strides = array<i32>} : memref<16x16x36xbf16, #tpu.memory_space<vmem>>, vector<16x16x4xbf16>,
    %c1_i32 = arith.constant 1 : i32
    %12 = arith.addi %1, %c1_i32 : i32
    %c0_9 = arith.constant 0 : index
    %13 = arith.index_cast %12 : i32 to index
    %c0_10 = arith.constant 0 : index
    %c0_11 = arith.constant 0 : index
    %14 = vector.load %arg2[%c0_9, %13, %c0_10, %c0_11] : memref<1x18x18x4xbf16, #tpu.memory_space<vmem>>, vector<1x16x18x4xbf16>
    %15 = vector.shape_cast %14 : vector<1x16x18x4xbf16> to vector<16x18x4xbf16>
    %16 = vector.extract_strided_slice %15 {offsets = [0, 0, 0], sizes = [16, 16, 4], strides = [1, 1, 1]} : vector<16x18x4xbf16> to vector<16x16x4xbf16>
    %c0_12 = arith.constant 0 : index
    %c0_13 = arith.constant 0 : index
    %c12 = arith.constant 12 : index
    %17 = vector.load %arg6[%c0_12, %c0_13, %c12] : memref<16x16x36xbf16, #tpu.memory_space<vmem>>, vector<16x16x4xbf16>
    tpu.vector_store %arg6[%c0_12, %c0_13, %c12], %16 {strides = array<i32>} : memref<16x16x36xbf16, #tpu.memory_space<vmem>>, vector<16x16x4xbf16>,
    %18 = vector.extract_strided_slice %15 {offsets = [0, 1, 0], sizes = [16, 16, 4], strides = [1, 1, 1]} : vector<16x18x4xbf16> to vector<16x16x4xbf16>
    %c0_14 = arith.constant 0 : index
    %c0_15 = arith.constant 0 : index
    %c16 = arith.constant 16 : index
    %19 = vector.load %arg6[%c0_14, %c0_15, %c16] : memref<16x16x36xbf16, #tpu.memory_space<vmem>>, vector<16x16x4xbf16>
    tpu.vector_store %arg6[%c0_14, %c0_15, %c16], %18 {strides = array<i32>} : memref<16x16x36xbf16, #tpu.memory_space<vmem>>, vector<16x16x4xbf16>,
    %20 = vector.extract_strided_slice %15 {offsets = [0, 2, 0], sizes = [16, 16, 4], strides = [1, 1, 1]} : vector<16x18x4xbf16> to vector<16x16x4xbf16>
    %c0_16 = arith.constant 0 : index
    %c0_17 = arith.constant 0 : index
    %c20 = arith.constant 20 : index
    %21 = vector.load %arg6[%c0_16, %c0_17, %c20] : memref<16x16x36xbf16, #tpu.memory_space<vmem>>, vector<16x16x4xbf16>
    tpu.vector_store %arg6[%c0_16, %c0_17, %c20], %20 {strides = array<i32>} : memref<16x16x36xbf16, #tpu.memory_space<vmem>>, vector<16x16x4xbf16>,
    %c2_i32 = arith.constant 2 : i32
    %22 = arith.addi %1, %c2_i32 : i32
    %c0_18 = arith.constant 0 : index
    %23 = arith.index_cast %22 : i32 to index
    %c0_19 = arith.constant 0 : index
    %c0_20 = arith.constant 0 : index
    %24 = vector.load %arg2[%c0_18, %23, %c0_19, %c0_20] : memref<1x18x18x4xbf16, #tpu.memory_space<vmem>>, vector<1x16x18x4xbf16>
    %25 = vector.shape_cast %24 : vector<1x16x18x4xbf16> to vector<16x18x4xbf16>
    %26 = vector.extract_strided_slice %25 {offsets = [0, 0, 0], sizes = [16, 16, 4], strides = [1, 1, 1]} : vector<16x18x4xbf16> to vector<16x16x4xbf16>
    %c0_21 = arith.constant 0 : index
    %c0_22 = arith.constant 0 : index
    %c24 = arith.constant 24 : index
    %27 = vector.load %arg6[%c0_21, %c0_22, %c24] : memref<16x16x36xbf16, #tpu.memory_space<vmem>>, vector<16x16x4xbf16>
    tpu.vector_store %arg6[%c0_21, %c0_22, %c24], %26 {strides = array<i32>} : memref<16x16x36xbf16, #tpu.memory_space<vmem>>, vector<16x16x4xbf16>,
    %28 = vector.extract_strided_slice %25 {offsets = [0, 1, 0], sizes = [16, 16, 4], strides = [1, 1, 1]} : vector<16x18x4xbf16> to vector<16x16x4xbf16>
    %c0_23 = arith.constant 0 : index
    %c0_24 = arith.constant 0 : index
    %c28 = arith.constant 28 : index
    %29 = vector.load %arg6[%c0_23, %c0_24, %c28] : memref<16x16x36xbf16, #tpu.memory_space<vmem>>, vector<16x16x4xbf16>
    tpu.vector_store %arg6[%c0_23, %c0_24, %c28], %28 {strides = array<i32>} : memref<16x16x36xbf16, #tpu.memory_space<vmem>>, vector<16x16x4xbf16>,
    %30 = vector.extract_strided_slice %25 {offsets = [0, 2, 0], sizes = [16, 16, 4], strides = [1, 1, 1]} : vector<16x18x4xbf16> to vector<16x16x4xbf16>
    %c0_25 = arith.constant 0 : index
    %c0_26 = arith.constant 0 : index
    %c32 = arith.constant 32 : index
    %31 = vector.load %arg6[%c0_25, %c0_26, %c32] : memref<16x16x36xbf16, #tpu.memory_space<vmem>>, vector<16x16x4xbf16>
    tpu.vector_store %arg6[%c0_25, %c0_26, %c32], %30 {strides = array<i32>} : memref<16x16x36xbf16, #tpu.memory_space<vmem>>, vector<16x16x4xbf16>,
    %c0_27 = arith.constant 0 : index
    %c0_28 = arith.constant 0 : index
    %c0_29 = arith.constant 0 : index
    %32 = vector.load %arg6[%c0_27, %c0_28, %c0_29] : memref<16x16x36xbf16, #tpu.memory_space<vmem>>, vector<16x16x36xbf16>
    %33 = vector.shape_cast %32 : vector<16x16x36xbf16> to vector<256x36xbf16>
    %c0_30 = arith.constant 0 : index
    %c0_31 = arith.constant 0 : index
    %34 = vector.load %arg3[%c0_30, %c0_31] : memref<36x128xbf16, #tpu.memory_space<vmem>>, vector<36x128xbf16>
    %cst = arith.constant dense<0.000000e+00> : vector<256x128xf32>
    %35 = tpu.matmul %33, %34, %cst {dimension_numbers = #tpu.dot_dimension_numbers<[1], [0], [0], [1], [0, 0, 1, 1], [], []>} : vector<256x36xbf16>, vector<36x128xbf16>, vector<256x128xf32> -> vector<256x128xf32>
    %c0_32 = arith.constant 0 : index
    %c0_33 = arith.constant 0 : index
    %36 = vector.load %arg4[%c0_32, %c0_33] : memref<1x128xf32, #tpu.memory_space<vmem>>, vector<1x128xf32>
    %37 = vector.broadcast %36 : vector<1x128xf32> to vector<256x128xf32>
    %38 = arith.addf %35, %37 : vector<256x128xf32>
    %cst_34 = arith.constant 0.000000e+00 : f32
    %39 = vector.broadcast %cst_34 : f32 to vector<256x128xf32>
    %40 = arith.maximumf %38, %39 : vector<256x128xf32>
    %c0_35 = arith.constant 0 : index
    %c0_36 = arith.constant 0 : index
    %c0_37 = arith.constant 0 : index
    %41 = vector.load %arg5[%c0_35, %c0_36, %c0_37] : memref<1x256x128xf32, #tpu.memory_space<vmem>>, vector<1x256x128xf32>
    %42 = vector.shape_cast %41 : vector<1x256x128xf32> to vector<256x128xf32>
    %43 = vector.shape_cast %40 : vector<256x128xf32> to vector<1x256x128xf32>
    tpu.vector_store %arg5[%c0_35, %c0_36, %c0_37], %43 {strides = array<i32>} : memref<1x256x128xf32, #tpu.memory_space<vmem>>, vector<1x256x128xf32>,
    return
  }
  func.func @transform_0(%arg0: i32, %arg1: i32) -> (i32, i32, i32, i32) {
    %c0_i32 = arith.constant 0 : i32
    %c0_i32_0 = arith.constant 0 : i32
    %c0_i32_1 = arith.constant 0 : i32
    %c0_i32_2 = arith.constant 0 : i32
    return %arg0, %c0_i32, %c0_i32_0, %c0_i32_1 : i32, i32, i32, i32
  }
  func.func @transform_1(%arg0: i32, %arg1: i32) -> (i32, i32) {
    %c0_i32 = arith.constant 0 : i32
    %c0_i32_0 = arith.constant 0 : i32
    %c0_i32_1 = arith.constant 0 : i32
    return %c0_i32, %c0_i32_0 : i32, i32
  }
  func.func @transform_2(%arg0: i32, %arg1: i32) -> (i32, i32) {
    %c0_i32 = arith.constant 0 : i32
    %c0_i32_0 = arith.constant 0 : i32
    %c0_i32_1 = arith.constant 0 : i32
    return %c0_i32, %c0_i32_0 : i32, i32
  }
  func.func @transform_3(%arg0: i32, %arg1: i32) -> (i32, i32, i32) {
    %c0_i32 = arith.constant 0 : i32
    %c0_i32_0 = arith.constant 0 : i32
    return %arg0, %arg1, %c0_i32 : i32, i32, i32
  }
}

</mosaic_0001>

<llo_original>
// kernel: tpu_custom_call.1
$region0: #{tpu_custom_call.1}
  #allocation0 [shape = 'u32[]', space=smem, size = 0x4, offset = 0x4, fixed_abs, tag = 'smem constant byte address 0x4 - core index']
  #allocation1 [shape = 'u32[144,128]{1,0:T(1,128)}', space=vmem, size = 0x12000, scoped, tag = 'internal scratch']
  #allocation2 [shape = 'bf16[16,16,36]{2,1,0:T(16,128)(2,1)}', space=vmem, size = 0x10000, scoped, tag = 'scratch operand']
  %s0 = inlined_call_operand.vmem [shape: bf16[2,18,18,4], index: 0, kind: input, shape index: {}]
  %s1 = inlined_call_operand.vmem [shape: bf16[36,128], index: 1, kind: input, shape index: {}]
  %s2 = inlined_call_operand.vmem [shape: f32[1,128], index: 2, kind: input, shape index: {}]
  %s3 = inlined_call_operand.hbm [shape: f32[2,256,128], index: 3, kind: output, shape index: {}]
  %s4 = sld [smem:[#allocation0]]
  $region45: #{tpu_custom_call.1} parent=0
    _
  %s6 = ssub.s32 1, %s4
  %s7 = scalar_select 0, %s6, %s4
  $region1: #{tpu_custom_call.1} parent=0
    #allocation3 [shape = 'u8[262144]{0}', space=vmem, size = 0x40000, scoped, tag = 'output window, operand 0']
    #allocation4 [shape = 's32[2]{0}', space=sflag, size = 0x8, scoped, tag = 'scoped memory for tpu_custom_call.1']
    %8 = vsyncpa [#allocation4], 0
    %s9 = scalar_lea.sflag [#allocation4], 1
    %10 = vsyncpa %s9, 0
    loop: start=0, step=1, limit=4
    $region2: #{tpu_custom_call.1} parent=1 // loop_pre_header
      _
    $region3: #{tpu_custom_call.1} parent=1 // loop_header
      %s12 = sphi 0, %s16
      %p13 = scmp.ge.s32.totalorder %s12, 4
      %s19 = sphi 0, %s31
      %s20 = sphi 0, %s27
      %s21 = sphi 0, %s19
      %s22 = sphi 0, %s20
      %s23 = sphi 0, %s21
      %s24 = sphi 0, %s22
      %s34 = sphi 0, %s36
      %s37 = sphi 0, %s34
      %s38 = sphi 0, %s37
      %s54 = sphi 0, %s38
      %s58 = sphi 0, %s58
      %s60 = sphi 0, %s58
      %s61 = sphi 0, %s60
      %s75 = sphi 0, %s61
      %s79 = sphi 0, %s79
      %s81 = sphi 0, %s79
      %s82 = sphi 0, %s81
      %s96 = sphi 0, %s82
      %s104 = sphi 0, %s106
      %s107 = sphi 0, %s104
      %s108 = sphi 0, %s107
      %s124 = sphi 0, %s108
    $region4: #{tpu_custom_call.1} parent=1 // loop_header_branch
      %15 = sbr.rel (%p13) target = $region8
    $region5: #{tpu_custom_call.1} parent=1 // loop_body
      %s17 = ssub.s32 %s12, 1
      %s18 = ssub.s32 %s12, 2
      %s25 = sadd.s32 1, %s20
      %p26 = scmp.ge.s32.totalorder %s25, 1
      %s27 = scalar_select %p26, 0, %s25
      %s28 = sadd.s32 1, %s19
      %s29 = scalar_select %p26, %s28, %s19
      %p30 = scmp.ge.s32.totalorder %s29, 2
      %s31 = scalar_select %p30, 0, %s29
      %s32 = ssub.s32 %s19, %s31
      %p33 = scmp.eq.s32.totalorder %s32, 0
      %s35 = sadd.s32 %s34, 1
      %s36 = scalar_select %p33, %s34, %s35
      %p39 = pneg %p33
      %p40 = scmp.eq.s32.totalorder %s12, 1
      %p41 = por %p39, %p40
      %p42 = scmp.ne.s32.totalorder %s34, %s37
      %p43 = scmp.eq.s32.totalorder %s12, 0
      %p44 = por %p42, %p43
      %p45 = scmp.ne.s32.totalorder %s34, %s37
      %p46 = scmp.eq.s32.totalorder %s17, 1
      %p47 = por %p45, %p46
      %p48 = scmp.ne.s32.totalorder %s37, %s38
      %p49 = scmp.eq.s32.totalorder %s17, 0
      %p50 = por %p48, %p49
      %p51 = scmp.ne.s32.totalorder %s37, %s38
      %p52 = scmp.eq.s32.totalorder %s18, 1
      %p53 = por %p51, %p52
      %p55 = scmp.ne.s32.totalorder %s38, %s54
      %p56 = scmp.eq.s32.totalorder %s18, 0
      %p57 = por %p55, %p56
      %s59 = sadd.s32 %s58, 1
      %p62 = scmp.eq.s32.totalorder %s12, 1
      %p63 = scmp.ne.s32.totalorder %s58, %s60
      %p64 = scmp.eq.s32.totalorder %s12, 0
      %p65 = por %p63, %p64
      %p66 = scmp.ne.s32.totalorder %s58, %s60
      %p67 = scmp.eq.s32.totalorder %s17, 1
      %p68 = por %p66, %p67
      %p69 = scmp.ne.s32.totalorder %s60, %s61
      %p70 = scmp.eq.s32.totalorder %s17, 0
      %p71 = por %p69, %p70
      %p72 = scmp.ne.s32.totalorder %s60, %s61
      %p73 = scmp.eq.s32.totalorder %s18, 1
      %p74 = por %p72, %p73
      %p76 = scmp.ne.s32.totalorder %s61, %s75
      %p77 = scmp.eq.s32.totalorder %s18, 0
      %p78 = por %p76, %p77
      %s80 = sadd.s32 %s79, 1
      %p83 = scmp.eq.s32.totalorder %s12, 1
      %p84 = scmp.ne.s32.totalorder %s79, %s81
      %p85 = scmp.eq.s32.totalorder %s12, 0
      %p86 = por %p84, %p85
      %p87 = scmp.ne.s32.totalorder %s79, %s81
      %p88 = scmp.eq.s32.totalorder %s17, 1
      %p89 = por %p87, %p88
      %p90 = scmp.ne.s32.totalorder %s81, %s82
      %p91 = scmp.eq.s32.totalorder %s17, 0
      %p92 = por %p90, %p91
      %p93 = scmp.ne.s32.totalorder %s81, %s82
      %p94 = scmp.eq.s32.totalorder %s18, 1
      %p95 = por %p93, %p94
      %p97 = scmp.ne.s32.totalorder %s82, %s96
      %p98 = scmp.eq.s32.totalorder %s18, 0
      %p99 = por %p97, %p98
      %s100 = ssub.s32 %s19, %s31
      %s101 = ssub.s32 %s20, %s27
      %s102 = sor.u32 %s100, %s101
      %p103 = scmp.eq.s32.totalorder %s102, 0
      %s105 = sadd.s32 %s104, 1
      %s106 = scalar_select %p103, %s104, %s105
      %p109 = pneg %p103
      %p110 = scmp.eq.s32.totalorder %s12, 1
      %p111 = por %p109, %p110
      %p112 = scmp.ne.s32.totalorder %s104, %s107
      %p113 = scmp.eq.s32.totalorder %s12, 0
      %p114 = por %p112, %p113
      %p115 = scmp.ne.s32.totalorder %s104, %s107
      %p116 = scmp.eq.s32.totalorder %s17, 1
      %p117 = por %p115, %p116
      %p118 = scmp.ne.s32.totalorder %s107, %s108
      %p119 = scmp.eq.s32.totalorder %s17, 0
      %p120 = por %p118, %p119
      %p121 = scmp.ne.s32.totalorder %s107, %s108
      %p122 = scmp.eq.s32.totalorder %s18, 1
      %p123 = por %p121, %p122
      %p125 = scmp.ne.s32.totalorder %s108, %s124
      %p126 = scmp.eq.s32.totalorder %s18, 0
      %p127 = por %p125, %p126
      %p128 = scmp.le.s32.totalorder 1, %s12
      %p129 = scmp.lt.s32.totalorder %s12, 3
      %p130 = pnand %p128, %p129
      %p131 = pneg %p130
      // Predicated region
      $region9: #{tpu_custom_call.1} parent=5 // pred_check
        _
      $region10: #{tpu_custom_call.1} parent=5 // pred_check_branch
        %133 = sbr.rel (%p130) target = $region12
      $region11: #{tpu_custom_call.1} parent=5 // pred_region
        %s134 = ssub.s32 %s12, 1
        // Predicated region
        $region13: #{tpu_custom_call.1} parent=11 // pred_check
          %p135 = pneg %p71
        $region14: #{tpu_custom_call.1} parent=11 // pred_check_branch
          %137 = sbr.rel (%p135) target = $region16
        $region15: #{tpu_custom_call.1} parent=11 // pred_region
          _
        $region16: #{tpu_custom_call.1} parent=11 // pred_fallthru
          _
        // Predicated region
        $region17: #{tpu_custom_call.1} parent=11 // pred_check
          %p138 = pneg %p92
        $region18: #{tpu_custom_call.1} parent=11 // pred_check_branch
          %140 = sbr.rel (%p138) target = $region20
        $region19: #{tpu_custom_call.1} parent=11 // pred_region
          _
        $region20: #{tpu_custom_call.1} parent=11 // pred_fallthru
          _
      $region12: #{tpu_custom_call.1} parent=5 // pred_fallthru
        _
      %p141 = scmp.lt.s32.totalorder %s12, 2
      // Predicated region
      $region21: #{tpu_custom_call.1} parent=5 // pred_check
        %p142 = pneg %p141
      $region22: #{tpu_custom_call.1} parent=5 // pred_check_branch
        %144 = sbr.rel (%p142) target = $region24
      $region23: #{tpu_custom_call.1} parent=5 // pred_region
        // Predicated region
        $region25: #{tpu_custom_call.1} parent=23 // pred_check
          %p145 = pneg %p44
        $region26: #{tpu_custom_call.1} parent=23 // pred_check_branch
          %147 = sbr.rel (%p145) target = $region28
        $region27: #{tpu_custom_call.1} parent=23 // pred_region
          %p148 = scmp.lt.s32.totalorder %s19, 1
          %s149 = scalar_select %p148, %s19, 1
          %s150 = smul.addr %s149, 54
          %s151 = smul.addr %s150, 4
          %s152 = scalar_lea.vmem %s0, %s151
        $region28: #{tpu_custom_call.1} parent=23 // pred_fallthru
          _
      $region24: #{tpu_custom_call.1} parent=5 // pred_fallthru
        _
      %p153 = scmp.le.s32.totalorder 1, %s12
      %p154 = scmp.lt.s32.totalorder %s12, 3
      %p155 = pnand %p153, %p154
      %p156 = pneg %p155
      // Predicated region
      $region29: #{tpu_custom_call.1} parent=5 // pred_check
        _
      $region30: #{tpu_custom_call.1} parent=5 // pred_check_branch
        %158 = sbr.rel (%p155) target = $region32
      $region31: #{tpu_custom_call.1} parent=5 // pred_region
        %s159 = ssub.s32 %s12, 1
        %p160 = scmp.lt.s32.totalorder %s21, 1
        %s161 = scalar_select %p160, %s21, 1
        %s162 = smul.addr %s161, 54
        %s163 = smul.addr %s162, 4
        %s164 = scalar_lea.vmem %s0, %s163
        %p165 = pneg %p50
        %p166 = pneg %p47
        %p167 = pneg %p71
        %p168 = pneg %p68
        %p169 = pneg %p92
        %p170 = pneg %p89
        %p171 = pneg %p120
        %p172 = pneg %p117
        %s173 = sand.u32 %s107, 1
        %s174 = scalar_lea.sflag [#allocation4], %s173
        %s175 = sand.u32 %s107, 1
        %s176 = smul.addr %s175, 256
        %s177 = scalar_lea.vmem [#allocation3], %s176
        %p178 = scmp.lt.s32.totalorder %s21, 1
        %s179 = scalar_select %p178, %s21, 1
        %s180 = smul.addr %s179, 54
        %s181 = smul.addr %s180, 4
        %s182 = scalar_lea.vmem %s0, %s181
        %s183 = smul.u32 32, %s22
        %s185 = smul.u32 %s22, 16
        %s186 = smul.u32 %s185, 3
        %s187 = smul.addr %s186, 4
        %s188 = scalar_lea.vmem %s182, %s187
        %v189 = vld [vmem:[%s188] sm:$0xf]
        %v190 = vld [vmem:[%s188 + $0x4] sm:$0xf]
        %v191 = vld [vmem:[%s188 + $0x8] sm:$0x1]
        %v192 = vld [vmem:[%s188 + $0xc] sm:$0xf]
        %v193 = vld [vmem:[%s188 + $0x10] sm:$0xf]
        %v194 = vld [vmem:[%s188 + $0x14] sm:$0x1]
        %v195 = vld [vmem:[%s188 + $0x18] sm:$0xf]
        %v196 = vld [vmem:[%s188 + $0x1c] sm:$0xf]
        %v197 = vld [vmem:[%s188 + $0x20] sm:$0x1]
        %v198 = vld [vmem:[%s188 + $0x24] sm:$0xf]
        %v199 = vld [vmem:[%s188 + $0x28] sm:$0xf]
        %v200 = vld [vmem:[%s188 + $0x2c] sm:$0x1]
        %v201 = vld [vmem:[%s188 + $0x30] sm:$0xf]
        %v202 = vld [vmem:[%s188 + $0x34] sm:$0xf]
        %v203 = vld [vmem:[%s188 + $0x38] sm:$0x1]
        %v204 = vld [vmem:[%s188 + $0x3c] sm:$0xf]
        %v205 = vld [vmem:[%s188 + $0x40] sm:$0xf]
        %v206 = vld [vmem:[%s188 + $0x44] sm:$0x1]
        %v207 = vld [vmem:[%s188 + $0x48] sm:$0xf]
        %v208 = vld [vmem:[%s188 + $0x4c] sm:$0xf]
        %v209 = vld [vmem:[%s188 + $0x50] sm:$0x1]
        %v210 = vld [vmem:[%s188 + $0x54] sm:$0xf]
        %v211 = vld [vmem:[%s188 + $0x58] sm:$0xf]
        %v212 = vld [vmem:[%s188 + $0x5c] sm:$0x1]
        %v213 = vld [vmem:[%s188 + $0x60] sm:$0xf]
        %v214 = vld [vmem:[%s188 + $0x64] sm:$0xf]
        %v215 = vld [vmem:[%s188 + $0x68] sm:$0x1]
        %v216 = vld [vmem:[%s188 + $0x6c] sm:$0xf]
        %v217 = vld [vmem:[%s188 + $0x70] sm:$0xf]
        %v218 = vld [vmem:[%s188 + $0x74] sm:$0x1]
        %v219 = vld [vmem:[%s188 + $0x78] sm:$0xf]
        %v220 = vld [vmem:[%s188 + $0x7c] sm:$0xf]
        %v221 = vld [vmem:[%s188 + $0x80] sm:$0x1]
        %v222 = vld [vmem:[%s188 + $0x84] sm:$0xf]
        %v223 = vld [vmem:[%s188 + $0x88] sm:$0xf]
        %v224 = vld [vmem:[%s188 + $0x8c] sm:$0x1]
        %v225 = vld [vmem:[%s188 + $0x90] sm:$0xf]
        %v226 = vld [vmem:[%s188 + $0x94] sm:$0xf]
        %v227 = vld [vmem:[%s188 + $0x98] sm:$0x1]
        %v228 = vld [vmem:[%s188 + $0x9c] sm:$0xf]
        %v229 = vld [vmem:[%s188 + $0xa0] sm:$0xf]
        %v230 = vld [vmem:[%s188 + $0xa4] sm:$0x1]
        %v231 = vld [vmem:[%s188 + $0xa8] sm:$0xf]
        %v232 = vld [vmem:[%s188 + $0xac] sm:$0xf]
        %v233 = vld [vmem:[%s188 + $0xb0] sm:$0x1]
        %v234 = vld [vmem:[%s188 + $0xb4] sm:$0xf]
        %v235 = vld [vmem:[%s188 + $0xb8] sm:$0xf]
        %v236 = vld [vmem:[%s188 + $0xbc] sm:$0x1]
        %v269 = vunpack.c.l.b16 %v189
        %v270 = vunpack.c.l.b16 %v190
        %v271 = vunpack.c.l.b16 %v192
        %v272 = vunpack.c.l.b16 %v193
        %v273 = vunpack.c.l.b16 %v195
        %v274 = vunpack.c.l.b16 %v196
        %v275 = vunpack.c.l.b16 %v198
        %v276 = vunpack.c.l.b16 %v199
        %v277 = vunpack.c.l.b16 %v201
        %v278 = vunpack.c.l.b16 %v202
        %v279 = vunpack.c.l.b16 %v204
        %v280 = vunpack.c.l.b16 %v205
        %v281 = vunpack.c.l.b16 %v207
        %v282 = vunpack.c.l.b16 %v208
        %v283 = vunpack.c.l.b16 %v210
        %v284 = vunpack.c.l.b16 %v211
        %v285 = vunpack.c.l.b16 %v213
        %v286 = vunpack.c.l.b16 %v214
        %v287 = vunpack.c.l.b16 %v216
        %v288 = vunpack.c.l.b16 %v217
        %v289 = vunpack.c.l.b16 %v219
        %v290 = vunpack.c.l.b16 %v220
        %v291 = vunpack.c.l.b16 %v222
        %v292 = vunpack.c.l.b16 %v223
        %v293 = vunpack.c.l.b16 %v225
        %v294 = vunpack.c.l.b16 %v226
        %v295 = vunpack.c.l.b16 %v228
        %v296 = vunpack.c.l.b16 %v229
        %v297 = vunpack.c.l.b16 %v231
        %v298 = vunpack.c.l.b16 %v232
        %v299 = vunpack.c.l.b16 %v234
        %v300 = vunpack.c.l.b16 %v235
        %v301 = vpack.c.b16 %v270, %v269
        %v302 = vpack.c.b16 %v272, %v271
        %v303 = vpack.c.b16 %v274, %v273
        %v304 = vpack.c.b16 %v276, %v275
        %v305 = vpack.c.b16 %v278, %v277
        %v306 = vpack.c.b16 %v280, %v279
        %v307 = vpack.c.b16 %v282, %v281
        %v308 = vpack.c.b16 %v284, %v283
        %v309 = vpack.c.b16 %v286, %v285
        %v310 = vpack.c.b16 %v288, %v287
        %v311 = vpack.c.b16 %v290, %v289
        %v312 = vpack.c.b16 %v292, %v291
        %v313 = vpack.c.b16 %v294, %v293
        %v314 = vpack.c.b16 %v296, %v295
        %v315 = vpack.c.b16 %v298, %v297
        %v316 = vpack.c.b16 %v300, %v299
        %vm333 = vcmask 31744
        %334 = vst.msk [vmem:[#allocation2] sm:$0xff] %vm333, %v301
        %335 = vst.msk [vmem:[#allocation2 + $0x8] sm:$0xff] %vm333, %v302
        %336 = vst.msk [vmem:[#allocation2 + $0x10] sm:$0xff] %vm333, %v303
        %337 = vst.msk [vmem:[#allocation2 + $0x18] sm:$0xff] %vm333, %v304
        %338 = vst.msk [vmem:[#allocation2 + $0x20] sm:$0xff] %vm333, %v305
        %339 = vst.msk [vmem:[#allocation2 + $0x28] sm:$0xff] %vm333, %v306
        %340 = vst.msk [vmem:[#allocation2 + $0x30] sm:$0xff] %vm333, %v307
        %341 = vst.msk [vmem:[#allocation2 + $0x38] sm:$0xff] %vm333, %v308
        %342 = vst.msk [vmem:[#allocation2 + $0x40] sm:$0xff] %vm333, %v309
        %343 = vst.msk [vmem:[#allocation2 + $0x48] sm:$0xff] %vm333, %v310
        %344 = vst.msk [vmem:[#allocation2 + $0x50] sm:$0xff] %vm333, %v311
        %345 = vst.msk [vmem:[#allocation2 + $0x58] sm:$0xff] %vm333, %v312
        %346 = vst.msk [vmem:[#allocation2 + $0x60] sm:$0xff] %vm333, %v313
        %347 = vst.msk [vmem:[#allocation2 + $0x68] sm:$0xff] %vm333, %v314
        %348 = vst.msk [vmem:[#allocation2 + $0x70] sm:$0xff] %vm333, %v315
        %349 = vst.msk [vmem:[#allocation2 + $0x78] sm:$0xff] %vm333, %v316
        %v366 = vunpack.c.l.b16 %v191
        %v367 = vunpack.c.l.b16 %v194
        %v368 = vunpack.c.l.b16 %v197
        %v369 = vunpack.c.l.b16 %v200
        %v370 = vunpack.c.l.b16 %v203
        %v371 = vunpack.c.l.b16 %v206
        %v372 = vunpack.c.l.b16 %v209
        %v373 = vunpack.c.l.b16 %v212
        %v374 = vunpack.c.l.b16 %v215
        %v375 = vunpack.c.l.b16 %v218
        %v376 = vunpack.c.l.b16 %v221
        %v377 = vunpack.c.l.b16 %v224
        %v378 = vunpack.c.l.b16 %v227
        %v379 = vunpack.c.l.b16 %v230
        %v380 = vunpack.c.l.b16 %v233
        %v381 = vunpack.c.l.b16 %v236
        %v382 = vpack.c.b16 %v366, %v366
        %v383 = vpack.c.b16 %v367, %v367
        %v384 = vpack.c.b16 %v368, %v368
        %v385 = vpack.c.b16 %v369, %v369
        %v386 = vpack.c.b16 %v370, %v370
        %v387 = vpack.c.b16 %v371, %v371
        %v388 = vpack.c.b16 %v372, %v372
        %v389 = vpack.c.b16 %v373, %v373
        %v390 = vpack.c.b16 %v374, %v374
        %v391 = vpack.c.b16 %v375, %v375
        %v392 = vpack.c.b16 %v376, %v376
        %v393 = vpack.c.b16 %v377, %v377
        %v394 = vpack.c.b16 %v378, %v378
        %v395 = vpack.c.b16 %v379, %v379
        %v396 = vpack.c.b16 %v380, %v380
        %v397 = vpack.c.b16 %v381, %v381
        %vm398 = vsmask.f32 7424
        %v400 = vshrl.u32 %v301, 16
        %v402 = vshll.u32 %v301, 16
        %v404 = vrot.slane %v402, 1
        %v405 = vor.u32 %v400, %v404
        %v407 = vshll.u32 %v382, 16
        %v409 = vrot.slane %v407, 1
        %v410 = vsel %vm398, %v405, %v409
        %v412 = vshrl.u32 %v302, 16
        %v414 = vshll.u32 %v302, 16
        %v416 = vrot.slane %v414, 1
        %v417 = vor.u32 %v412, %v416
        %v419 = vshll.u32 %v383, 16
        %v421 = vrot.slane %v419, 1
        %v422 = vsel %vm398, %v417, %v421
        %v424 = vshrl.u32 %v303, 16
        %v426 = vshll.u32 %v303, 16
        %v428 = vrot.slane %v426, 1
        %v429 = vor.u32 %v424, %v428
        %v431 = vshll.u32 %v384, 16
        %v433 = vrot.slane %v431, 1
        %v434 = vsel %vm398, %v429, %v433
        %v436 = vshrl.u32 %v304, 16
        %v438 = vshll.u32 %v304, 16
        %v440 = vrot.slane %v438, 1
        %v441 = vor.u32 %v436, %v440
        %v443 = vshll.u32 %v385, 16
        %v445 = vrot.slane %v443, 1
        %v446 = vsel %vm398, %v441, %v445
        %v448 = vshrl.u32 %v305, 16
        %v450 = vshll.u32 %v305, 16
        %v452 = vrot.slane %v450, 1
        %v453 = vor.u32 %v448, %v452
        %v455 = vshll.u32 %v386, 16
        %v457 = vrot.slane %v455, 1
        %v458 = vsel %vm398, %v453, %v457
        %v460 = vshrl.u32 %v306, 16
        %v462 = vshll.u32 %v306, 16
        %v464 = vrot.slane %v462, 1
        %v465 = vor.u32 %v460, %v464
        %v467 = vshll.u32 %v387, 16
        %v469 = vrot.slane %v467, 1
        %v470 = vsel %vm398, %v465, %v469
        %v472 = vshrl.u32 %v307, 16
        %v474 = vshll.u32 %v307, 16
        %v476 = vrot.slane %v474, 1
        %v477 = vor.u32 %v472, %v476
        %v479 = vshll.u32 %v388, 16
        %v481 = vrot.slane %v479, 1
        %v482 = vsel %vm398, %v477, %v481
        %v484 = vshrl.u32 %v308, 16
        %v486 = vshll.u32 %v308, 16
        %v488 = vrot.slane %v486, 1
        %v489 = vor.u32 %v484, %v488
        %v491 = vshll.u32 %v389, 16
        %v493 = vrot.slane %v491, 1
        %v494 = vsel %vm398, %v489, %v493
        %v496 = vshrl.u32 %v309, 16
        %v498 = vshll.u32 %v309, 16
        %v500 = vrot.slane %v498, 1
        %v501 = vor.u32 %v496, %v500
        %v503 = vshll.u32 %v390, 16
        %v505 = vrot.slane %v503, 1
        %v506 = vsel %vm398, %v501, %v505
        %v508 = vshrl.u32 %v310, 16
        %v510 = vshll.u32 %v310, 16
        %v512 = vrot.slane %v510, 1
        %v513 = vor.u32 %v508, %v512
        %v515 = vshll.u32 %v391, 16
        %v517 = vrot.slane %v515, 1
        %v518 = vsel %vm398, %v513, %v517
        %v520 = vshrl.u32 %v311, 16
        %v522 = vshll.u32 %v311, 16
        %v524 = vrot.slane %v522, 1
        %v525 = vor.u32 %v520, %v524
        %v527 = vshll.u32 %v392, 16
        %v529 = vrot.slane %v527, 1
        %v530 = vsel %vm398, %v525, %v529
        %v532 = vshrl.u32 %v312, 16
        %v534 = vshll.u32 %v312, 16
        %v536 = vrot.slane %v534, 1
        %v537 = vor.u32 %v532, %v536
        %v539 = vshll.u32 %v393, 16
        %v541 = vrot.slane %v539, 1
        %v542 = vsel %vm398, %v537, %v541
        %v544 = vshrl.u32 %v313, 16
        %v546 = vshll.u32 %v313, 16
        %v548 = vrot.slane %v546, 1
        %v549 = vor.u32 %v544, %v548
        %v551 = vshll.u32 %v394, 16
        %v553 = vrot.slane %v551, 1
        %v554 = vsel %vm398, %v549, %v553
        %v556 = vshrl.u32 %v314, 16
        %v558 = vshll.u32 %v314, 16
        %v560 = vrot.slane %v558, 1
        %v561 = vor.u32 %v556, %v560
        %v563 = vshll.u32 %v395, 16
        %v565 = vrot.slane %v563, 1
        %v566 = vsel %vm398, %v561, %v565
        %v568 = vshrl.u32 %v315, 16
        %v570 = vshll.u32 %v315, 16
        %v572 = vrot.slane %v570, 1
        %v573 = vor.u32 %v568, %v572
        %v575 = vshll.u32 %v396, 16
        %v577 = vrot.slane %v575, 1
        %v578 = vsel %vm398, %v573, %v577
        %v580 = vshrl.u32 %v316, 16
        %v582 = vshll.u32 %v316, 16
        %v584 = vrot.slane %v582, 1
        %v585 = vor.u32 %v580, %v584
        %v587 = vshll.u32 %v397, 16
        %v589 = vrot.slane %v587, 1
        %v590 = vsel %vm398, %v585, %v589
        %591 = vrot.lane.b32.xlu0 %v410, 4
        %v592 = vpop.permute.xlu0 %591
        %593 = vrot.lane.b32.xlu0 %v422, 4
        %v594 = vpop.permute.xlu0 %593
        %595 = vrot.lane.b32.xlu0 %v434, 4
        %v596 = vpop.permute.xlu0 %595
        %597 = vrot.lane.b32.xlu0 %v446, 4
        %v598 = vpop.permute.xlu0 %597
        %599 = vrot.lane.b32.xlu0 %v458, 4
        %v600 = vpop.permute.xlu0 %599
        %601 = vrot.lane.b32.xlu0 %v470, 4
        %v602 = vpop.permute.xlu0 %601
        %603 = vrot.lane.b32.xlu0 %v482, 4
        %v604 = vpop.permute.xlu0 %603
        %605 = vrot.lane.b32.xlu0 %v494, 4
        %v606 = vpop.permute.xlu0 %605
        %607 = vrot.lane.b32.xlu0 %v506, 4
        %v608 = vpop.permute.xlu0 %607
        %609 = vrot.lane.b32.xlu0 %v518, 4
        %v610 = vpop.permute.xlu0 %609
        %611 = vrot.lane.b32.xlu0 %v530, 4
        %v612 = vpop.permute.xlu0 %611
        %613 = vrot.lane.b32.xlu0 %v542, 4
        %v614 = vpop.permute.xlu0 %613
        %615 = vrot.lane.b32.xlu0 %v554, 4
        %v616 = vpop.permute.xlu0 %615
        %617 = vrot.lane.b32.xlu0 %v566, 4
        %v618 = vpop.permute.xlu0 %617
        %619 = vrot.lane.b32.xlu0 %v578, 4
        %v620 = vpop.permute.xlu0 %619
        %621 = vrot.lane.b32.xlu0 %v590, 4
        %v622 = vpop.permute.xlu0 %621
        %vm639 = vcmask 64544
        %640 = vst.msk [vmem:[#allocation2] sm:$0xff] %vm639, %v592
        %641 = vst.msk [vmem:[#allocation2 + $0x8] sm:$0xff] %vm639, %v594
        %642 = vst.msk [vmem:[#allocation2 + $0x10] sm:$0xff] %vm639, %v596
        %643 = vst.msk [vmem:[#allocation2 + $0x18] sm:$0xff] %vm639, %v598
        %644 = vst.msk [vmem:[#allocation2 + $0x20] sm:$0xff] %vm639, %v600
        %645 = vst.msk [vmem:[#allocation2 + $0x28] sm:$0xff] %vm639, %v602
        %646 = vst.msk [vmem:[#allocation2 + $0x30] sm:$0xff] %vm639, %v604
        %647 = vst.msk [vmem:[#allocation2 + $0x38] sm:$0xff] %vm639, %v606
        %648 = vst.msk [vmem:[#allocation2 + $0x40] sm:$0xff] %vm639, %v608
        %649 = vst.msk [vmem:[#allocation2 + $0x48] sm:$0xff] %vm639, %v610
        %650 = vst.msk [vmem:[#allocation2 + $0x50] sm:$0xff] %vm639, %v612
        %651 = vst.msk [vmem:[#allocation2 + $0x58] sm:$0xff] %vm639, %v614
        %652 = vst.msk [vmem:[#allocation2 + $0x60] sm:$0xff] %vm639, %v616
        %653 = vst.msk [vmem:[#allocation2 + $0x68] sm:$0xff] %vm639, %v618
        %654 = vst.msk [vmem:[#allocation2 + $0x70] sm:$0xff] %vm639, %v620
        %655 = vst.msk [vmem:[#allocation2 + $0x78] sm:$0xff] %vm639, %v622
        %vm656 = vcmask 1046528
        %v657 = vrot.slane %v301, 1
        %v658 = vrot.slane %v382, 1
        %v659 = vsel %vm656, %v657, %v658
        %v660 = vrot.slane %v302, 1
        %v661 = vrot.slane %v383, 1
        %v662 = vsel %vm656, %v660, %v661
        %v663 = vrot.slane %v303, 1
        %v664 = vrot.slane %v384, 1
        %v665 = vsel %vm656, %v663, %v664
        %v666 = vrot.slane %v304, 1
        %v667 = vrot.slane %v385, 1
        %v668 = vsel %vm656, %v666, %v667
        %v669 = vrot.slane %v305, 1
        %v670 = vrot.slane %v386, 1
        %v671 = vsel %vm656, %v669, %v670
        %v672 = vrot.slane %v306, 1
        %v673 = vrot.slane %v387, 1
        %v674 = vsel %vm656, %v672, %v673
        %v675 = vrot.slane %v307, 1
        %v676 = vrot.slane %v388, 1
        %v677 = vsel %vm656, %v675, %v676
        %v678 = vrot.slane %v308, 1
        %v679 = vrot.slane %v389, 1
        %v680 = vsel %vm656, %v678, %v679
        %v681 = vrot.slane %v309, 1
        %v682 = vrot.slane %v390, 1
        %v683 = vsel %vm656, %v681, %v682
        %v684 = vrot.slane %v310, 1
        %v685 = vrot.slane %v391, 1
        %v686 = vsel %vm656, %v684, %v685
        %v687 = vrot.slane %v311, 1
        %v688 = vrot.slane %v392, 1
        %v689 = vsel %vm656, %v687, %v688
        %v690 = vrot.slane %v312, 1
        %v691 = vrot.slane %v393, 1
        %v692 = vsel %vm656, %v690, %v691
        %v693 = vrot.slane %v313, 1
        %v694 = vrot.slane %v394, 1
        %v695 = vsel %vm656, %v693, %v694
        %v696 = vrot.slane %v314, 1
        %v697 = vrot.slane %v395, 1
        %v698 = vsel %vm656, %v696, %v697
        %v699 = vrot.slane %v315, 1
        %v700 = vrot.slane %v396, 1
        %v701 = vsel %vm656, %v699, %v700
        %v702 = vrot.slane %v316, 1
        %v703 = vrot.slane %v397, 1
        %v704 = vsel %vm656, %v702, %v703
        %705 = vrot.lane.b32.xlu0 %v659, 8
        %v706 = vpop.permute.xlu0 %705
        %707 = vrot.lane.b32.xlu0 %v662, 8
        %v708 = vpop.permute.xlu0 %707
        %709 = vrot.lane.b32.xlu0 %v665, 8
        %v710 = vpop.permute.xlu0 %709
        %711 = vrot.lane.b32.xlu0 %v668, 8
        %v712 = vpop.permute.xlu0 %711
        %713 = vrot.lane.b32.xlu0 %v671, 8
        %v714 = vpop.permute.xlu0 %713
        %715 = vrot.lane.b32.xlu0 %v674, 8
        %v716 = vpop.permute.xlu0 %715
        %717 = vrot.lane.b32.xlu0 %v677, 8
        %v718 = vpop.permute.xlu0 %717
        %719 = vrot.lane.b32.xlu0 %v680, 8
        %v720 = vpop.permute.xlu0 %719
        %721 = vrot.lane.b32.xlu0 %v683, 8
        %v722 = vpop.permute.xlu0 %721
        %723 = vrot.lane.b32.xlu0 %v686, 8
        %v724 = vpop.permute.xlu0 %723
        %725 = vrot.lane.b32.xlu0 %v689, 8
        %v726 = vpop.permute.xlu0 %725
        %727 = vrot.lane.b32.xlu0 %v692, 8
        %v728 = vpop.permute.xlu0 %727
        %729 = vrot.lane.b32.xlu0 %v695, 8
        %v730 = vpop.permute.xlu0 %729
        %731 = vrot.lane.b32.xlu0 %v698, 8
        %v732 = vpop.permute.xlu0 %731
        %733 = vrot.lane.b32.xlu0 %v701, 8
        %v734 = vpop.permute.xlu0 %733
        %735 = vrot.lane.b32.xlu0 %v704, 8
        %v736 = vpop.permute.xlu0 %735
        %vm753 = vcmask 97344
        %754 = vst.msk [vmem:[#allocation2] sm:$0xff] %vm753, %v706
        %755 = vst.msk [vmem:[#allocation2 + $0x8] sm:$0xff] %vm753, %v708
        %756 = vst.msk [vmem:[#allocation2 + $0x10] sm:$0xff] %vm753, %v710
        %757 = vst.msk [vmem:[#allocation2 + $0x18] sm:$0xff] %vm753, %v712
        %758 = vst.msk [vmem:[#allocation2 + $0x20] sm:$0xff] %vm753, %v714
        %759 = vst.msk [vmem:[#allocation2 + $0x28] sm:$0xff] %vm753, %v716
        %760 = vst.msk [vmem:[#allocation2 + $0x30] sm:$0xff] %vm753, %v718
        %761 = vst.msk [vmem:[#allocation2 + $0x38] sm:$0xff] %vm753, %v720
        %762 = vst.msk [vmem:[#allocation2 + $0x40] sm:$0xff] %vm753, %v722
        %763 = vst.msk [vmem:[#allocation2 + $0x48] sm:$0xff] %vm753, %v724
        %764 = vst.msk [vmem:[#allocation2 + $0x50] sm:$0xff] %vm753, %v726
        %765 = vst.msk [vmem:[#allocation2 + $0x58] sm:$0xff] %vm753, %v728
        %766 = vst.msk [vmem:[#allocation2 + $0x60] sm:$0xff] %vm753, %v730
        %767 = vst.msk [vmem:[#allocation2 + $0x68] sm:$0xff] %vm753, %v732
        %768 = vst.msk [vmem:[#allocation2 + $0x70] sm:$0xff] %vm753, %v734
        %769 = vst.msk [vmem:[#allocation2 + $0x78] sm:$0xff] %vm753, %v736
        %s770 = sadd.s32 %s185, 1
        %s771 = smul.u32 %s770, 3
        %s772 = smul.addr %s771, 4
        %s773 = scalar_lea.vmem %s182, %s772
        %v774 = vld [vmem:[%s773] sm:$0xf]
        %v775 = vld [vmem:[%s773 + $0x4] sm:$0xf]
        %v776 = vld [vmem:[%s773 + $0x8] sm:$0x1]
        %v777 = vld [vmem:[%s773 + $0xc] sm:$0xf]
        %v778 = vld [vmem:[%s773 + $0x10] sm:$0xf]
        %v779 = vld [vmem:[%s773 + $0x14] sm:$0x1]
        %v780 = vld [vmem:[%s773 + $0x18] sm:$0xf]
        %v781 = vld [vmem:[%s773 + $0x1c] sm:$0xf]
        %v782 = vld [vmem:[%s773 + $0x20] sm:$0x1]
        %v783 = vld [vmem:[%s773 + $0x24] sm:$0xf]
        %v784 = vld [vmem:[%s773 + $0x28] sm:$0xf]
        %v785 = vld [vmem:[%s773 + $0x2c] sm:$0x1]
        %v786 = vld [vmem:[%s773 + $0x30] sm:$0xf]
        %v787 = vld [vmem:[%s773 + $0x34] sm:$0xf]
        %v788 = vld [vmem:[%s773 + $0x38] sm:$0x1]
        %v789 = vld [vmem:[%s773 + $0x3c] sm:$0xf]
        %v790 = vld [vmem:[%s773 + $0x40] sm:$0xf]
        %v791 = vld [vmem:[%s773 + $0x44] sm:$0x1]
        %v792 = vld [vmem:[%s773 + $0x48] sm:$0xf]
        %v793 = vld [vmem:[%s773 + $0x4c] sm:$0xf]
        %v794 = vld [vmem:[%s773 + $0x50] sm:$0x1]
        %v795 = vld [vmem:[%s773 + $0x54] sm:$0xf]
        %v796 = vld [vmem:[%s773 + $0x58] sm:$0xf]
        %v797 = vld [vmem:[%s773 + $0x5c] sm:$0x1]
        %v798 = vld [vmem:[%s773 + $0x60] sm:$0xf]
        %v799 = vld [vmem:[%s773 + $0x64] sm:$0xf]
        %v800 = vld [vmem:[%s773 + $0x68] sm:$0x1]
        %v801 = vld [vmem:[%s773 + $0x6c] sm:$0xf]
        %v802 = vld [vmem:[%s773 + $0x70] sm:$0xf]
        %v803 = vld [vmem:[%s773 + $0x74] sm:$0x1]
        %v804 = vld [vmem:[%s773 + $0x78] sm:$0xf]
        %v805 = vld [vmem:[%s773 + $0x7c] sm:$0xf]
        %v806 = vld [vmem:[%s773 + $0x80] sm:$0x1]
        %v807 = vld [vmem:[%s773 + $0x84] sm:$0xf]
        %v808 = vld [vmem:[%s773 + $0x88] sm:$0xf]
        %v809 = vld [vmem:[%s773 + $0x8c] sm:$0x1]
        %v810 = vld [vmem:[%s773 + $0x90] sm:$0xf]
        %v811 = vld [vmem:[%s773 + $0x94] sm:$0xf]
        %v812 = vld [vmem:[%s773 + $0x98] sm:$0x1]
        %v813 = vld [vmem:[%s773 + $0x9c] sm:$0xf]
        %v814 = vld [vmem:[%s773 + $0xa0] sm:$0xf]
        %v815 = vld [vmem:[%s773 + $0xa4] sm:$0x1]
        %v816 = vld [vmem:[%s773 + $0xa8] sm:$0xf]
        %v817 = vld [vmem:[%s773 + $0xac] sm:$0xf]
        %v818 = vld [vmem:[%s773 + $0xb0] sm:$0x1]
        %v819 = vld [vmem:[%s773 + $0xb4] sm:$0xf]
        %v820 = vld [vmem:[%s773 + $0xb8] sm:$0xf]
        %v821 = vld [vmem:[%s773 + $0xbc] sm:$0x1]
        %v854 = vunpack.c.l.b16 %v774
        %v855 = vunpack.c.l.b16 %v775
        %v856 = vunpack.c.l.b16 %v777
        %v857 = vunpack.c.l.b16 %v778
        %v858 = vunpack.c.l.b16 %v780
        %v859 = vunpack.c.l.b16 %v781
        %v860 = vunpack.c.l.b16 %v783
        %v861 = vunpack.c.l.b16 %v784
        %v862 = vunpack.c.l.b16 %v786
        %v863 = vunpack.c.l.b16 %v787
        %v864 = vunpack.c.l.b16 %v789
        %v865 = vunpack.c.l.b16 %v790
        %v866 = vunpack.c.l.b16 %v792
        %v867 = vunpack.c.l.b16 %v793
        %v868 = vunpack.c.l.b16 %v795
        %v869 = vunpack.c.l.b16 %v796
        %v870 = vunpack.c.l.b16 %v798
        %v871 = vunpack.c.l.b16 %v799
        %v872 = vunpack.c.l.b16 %v801
        %v873 = vunpack.c.l.b16 %v802
        %v874 = vunpack.c.l.b16 %v804
        %v875 = vunpack.c.l.b16 %v805
        %v876 = vunpack.c.l.b16 %v807
        %v877 = vunpack.c.l.b16 %v808
        %v878 = vunpack.c.l.b16 %v810
        %v879 = vunpack.c.l.b16 %v811
        %v880 = vunpack.c.l.b16 %v813
        %v881 = vunpack.c.l.b16 %v814
        %v882 = vunpack.c.l.b16 %v816
        %v883 = vunpack.c.l.b16 %v817
        %v884 = vunpack.c.l.b16 %v819
        %v885 = vunpack.c.l.b16 %v820
        %v886 = vpack.c.b16 %v855, %v854
        %v887 = vpack.c.b16 %v857, %v856
        %v888 = vpack.c.b16 %v859, %v858
        %v889 = vpack.c.b16 %v861, %v860
        %v890 = vpack.c.b16 %v863, %v862
        %v891 = vpack.c.b16 %v865, %v864
        %v892 = vpack.c.b16 %v867, %v866
        %v893 = vpack.c.b16 %v869, %v868
        %v894 = vpack.c.b16 %v871, %v870
        %v895 = vpack.c.b16 %v873, %v872
        %v896 = vpack.c.b16 %v875, %v874
        %v897 = vpack.c.b16 %v877, %v876
        %v898 = vpack.c.b16 %v879, %v878
        %v899 = vpack.c.b16 %v881, %v880
        %v900 = vpack.c.b16 %v883, %v882
        %v901 = vpack.c.b16 %v885, %v884
        %902 = vrot.lane.b32.xlu0 %v886, 12
        %v903 = vpop.permute.xlu0 %902
        %904 = vrot.lane.b32.xlu0 %v887, 12
        %v905 = vpop.permute.xlu0 %904
        %906 = vrot.lane.b32.xlu0 %v888, 12
        %v907 = vpop.permute.xlu0 %906
        %908 = vrot.lane.b32.xlu0 %v889, 12
        %v909 = vpop.permute.xlu0 %908
        %910 = vrot.lane.b32.xlu0 %v890, 12
        %v911 = vpop.permute.xlu0 %910
        %912 = vrot.lane.b32.xlu0 %v891, 12
        %v913 = vpop.permute.xlu0 %912
        %914 = vrot.lane.b32.xlu0 %v892, 12
        %v915 = vpop.permute.xlu0 %914
        %916 = vrot.lane.b32.xlu0 %v893, 12
        %v917 = vpop.permute.xlu0 %916
        %918 = vrot.lane.b32.xlu0 %v894, 12
        %v919 = vpop.permute.xlu0 %918
        %920 = vrot.lane.b32.xlu0 %v895, 12
        %v921 = vpop.permute.xlu0 %920
        %922 = vrot.lane.b32.xlu0 %v896, 12
        %v923 = vpop.permute.xlu0 %922
        %924 = vrot.lane.b32.xlu0 %v897, 12
        %v925 = vpop.permute.xlu0 %924
        %926 = vrot.lane.b32.xlu0 %v898, 12
        %v927 = vpop.permute.xlu0 %926
        %928 = vrot.lane.b32.xlu0 %v899, 12
        %v929 = vpop.permute.xlu0 %928
        %930 = vrot.lane.b32.xlu0 %v900, 12
        %v931 = vpop.permute.xlu0 %930
        %932 = vrot.lane.b32.xlu0 %v901, 12
        %v933 = vpop.permute.xlu0 %932
        %vm950 = vcmask 130144
        %951 = vst.msk [vmem:[#allocation2] sm:$0xff] %vm950, %v903
        %952 = vst.msk [vmem:[#allocation2 + $0x8] sm:$0xff] %vm950, %v905
        %953 = vst.msk [vmem:[#allocation2 + $0x10] sm:$0xff] %vm950, %v907
        %954 = vst.msk [vmem:[#allocation2 + $0x18] sm:$0xff] %vm950, %v909
        %955 = vst.msk [vmem:[#allocation2 + $0x20] sm:$0xff] %vm950, %v911
        %956 = vst.msk [vmem:[#allocation2 + $0x28] sm:$0xff] %vm950, %v913
        %957 = vst.msk [vmem:[#allocation2 + $0x30] sm:$0xff] %vm950, %v915
        %958 = vst.msk [vmem:[#allocation2 + $0x38] sm:$0xff] %vm950, %v917
        %959 = vst.msk [vmem:[#allocation2 + $0x40] sm:$0xff] %vm950, %v919
        %960 = vst.msk [vmem:[#allocation2 + $0x48] sm:$0xff] %vm950, %v921
        %961 = vst.msk [vmem:[#allocation2 + $0x50] sm:$0xff] %vm950, %v923
        %962 = vst.msk [vmem:[#allocation2 + $0x58] sm:$0xff] %vm950, %v925
        %963 = vst.msk [vmem:[#allocation2 + $0x60] sm:$0xff] %vm950, %v927
        %964 = vst.msk [vmem:[#allocation2 + $0x68] sm:$0xff] %vm950, %v929
        %965 = vst.msk [vmem:[#allocation2 + $0x70] sm:$0xff] %vm950, %v931
        %966 = vst.msk [vmem:[#allocation2 + $0x78] sm:$0xff] %vm950, %v933
        %v983 = vunpack.c.l.b16 %v776
        %v984 = vunpack.c.l.b16 %v779
        %v985 = vunpack.c.l.b16 %v782
        %v986 = vunpack.c.l.b16 %v785
        %v987 = vunpack.c.l.b16 %v788
        %v988 = vunpack.c.l.b16 %v791
        %v989 = vunpack.c.l.b16 %v794
        %v990 = vunpack.c.l.b16 %v797
        %v991 = vunpack.c.l.b16 %v800
        %v992 = vunpack.c.l.b16 %v803
        %v993 = vunpack.c.l.b16 %v806
        %v994 = vunpack.c.l.b16 %v809
        %v995 = vunpack.c.l.b16 %v812
        %v996 = vunpack.c.l.b16 %v815
        %v997 = vunpack.c.l.b16 %v818
        %v998 = vunpack.c.l.b16 %v821
        %v999 = vpack.c.b16 %v983, %v983
        %v1000 = vpack.c.b16 %v984, %v984
        %v1001 = vpack.c.b16 %v985, %v985
        %v1002 = vpack.c.b16 %v986, %v986
        %v1003 = vpack.c.b16 %v987, %v987
        %v1004 = vpack.c.b16 %v988, %v988
        %v1005 = vpack.c.b16 %v989, %v989
        %v1006 = vpack.c.b16 %v990, %v990
        %v1007 = vpack.c.b16 %v991, %v991
        %v1008 = vpack.c.b16 %v992, %v992
        %v1009 = vpack.c.b16 %v993, %v993
        %v1010 = vpack.c.b16 %v994, %v994
        %v1011 = vpack.c.b16 %v995, %v995
        %v1012 = vpack.c.b16 %v996, %v996
        %v1013 = vpack.c.b16 %v997, %v997
        %v1014 = vpack.c.b16 %v998, %v998
        %v1016 = vshrl.u32 %v886, 16
        %v1018 = vshll.u32 %v886, 16
        %v1020 = vrot.slane %v1018, 1
        %v1021 = vor.u32 %v1016, %v1020
        %v1023 = vshll.u32 %v999, 16
        %v1025 = vrot.slane %v1023, 1
        %v1026 = vsel %vm398, %v1021, %v1025
        %v1028 = vshrl.u32 %v887, 16
        %v1030 = vshll.u32 %v887, 16
        %v1032 = vrot.slane %v1030, 1
        %v1033 = vor.u32 %v1028, %v1032
        %v1035 = vshll.u32 %v1000, 16
        %v1037 = vrot.slane %v1035, 1
        %v1038 = vsel %vm398, %v1033, %v1037
        %v1040 = vshrl.u32 %v888, 16
        %v1042 = vshll.u32 %v888, 16
        %v1044 = vrot.slane %v1042, 1
        %v1045 = vor.u32 %v1040, %v1044
        %v1047 = vshll.u32 %v1001, 16
        %v1049 = vrot.slane %v1047, 1
        %v1050 = vsel %vm398, %v1045, %v1049
        %v1052 = vshrl.u32 %v889, 16
        %v1054 = vshll.u32 %v889, 16
        %v1056 = vrot.slane %v1054, 1
        %v1057 = vor.u32 %v1052, %v1056
        %v1059 = vshll.u32 %v1002, 16
        %v1061 = vrot.slane %v1059, 1
        %v1062 = vsel %vm398, %v1057, %v1061
        %v1064 = vshrl.u32 %v890, 16
        %v1066 = vshll.u32 %v890, 16
        %v1068 = vrot.slane %v1066, 1
        %v1069 = vor.u32 %v1064, %v1068
        %v1071 = vshll.u32 %v1003, 16
        %v1073 = vrot.slane %v1071, 1
        %v1074 = vsel %vm398, %v1069, %v1073
        %v1076 = vshrl.u32 %v891, 16
        %v1078 = vshll.u32 %v891, 16
        %v1080 = vrot.slane %v1078, 1
        %v1081 = vor.u32 %v1076, %v1080
        %v1083 = vshll.u32 %v1004, 16
        %v1085 = vrot.slane %v1083, 1
        %v1086 = vsel %vm398, %v1081, %v1085
        %v1088 = vshrl.u32 %v892, 16
        %v1090 = vshll.u32 %v892, 16
        %v1092 = vrot.slane %v1090, 1
        %v1093 = vor.u32 %v1088, %v1092
        %v1095 = vshll.u32 %v1005, 16
        %v1097 = vrot.slane %v1095, 1
        %v1098 = vsel %vm398, %v1093, %v1097
        %v1100 = vshrl.u32 %v893, 16
        %v1102 = vshll.u32 %v893, 16
        %v1104 = vrot.slane %v1102, 1
        %v1105 = vor.u32 %v1100, %v1104
        %v1107 = vshll.u32 %v1006, 16
        %v1109 = vrot.slane %v1107, 1
        %v1110 = vsel %vm398, %v1105, %v1109
        %v1112 = vshrl.u32 %v894, 16
        %v1114 = vshll.u32 %v894, 16
        %v1116 = vrot.slane %v1114, 1
        %v1117 = vor.u32 %v1112, %v1116
        %v1119 = vshll.u32 %v1007, 16
        %v1121 = vrot.slane %v1119, 1
        %v1122 = vsel %vm398, %v1117, %v1121
        %v1124 = vshrl.u32 %v895, 16
        %v1126 = vshll.u32 %v895, 16
        %v1128 = vrot.slane %v1126, 1
        %v1129 = vor.u32 %v1124, %v1128
        %v1131 = vshll.u32 %v1008, 16
        %v1133 = vrot.slane %v1131, 1
        %v1134 = vsel %vm398, %v1129, %v1133
        %v1136 = vshrl.u32 %v896, 16
        %v1138 = vshll.u32 %v896, 16
        %v1140 = vrot.slane %v1138, 1
        %v1141 = vor.u32 %v1136, %v1140
        %v1143 = vshll.u32 %v1009, 16
        %v1145 = vrot.slane %v1143, 1
        %v1146 = vsel %vm398, %v1141, %v1145
        %v1148 = vshrl.u32 %v897, 16
        %v1150 = vshll.u32 %v897, 16
        %v1152 = vrot.slane %v1150, 1
        %v1153 = vor.u32 %v1148, %v1152
        %v1155 = vshll.u32 %v1010, 16
        %v1157 = vrot.slane %v1155, 1
        %v1158 = vsel %vm398, %v1153, %v1157
        %v1160 = vshrl.u32 %v898, 16
        %v1162 = vshll.u32 %v898, 16
        %v1164 = vrot.slane %v1162, 1
        %v1165 = vor.u32 %v1160, %v1164
        %v1167 = vshll.u32 %v1011, 16
        %v1169 = vrot.slane %v1167, 1
        %v1170 = vsel %vm398, %v1165, %v1169
        %v1172 = vshrl.u32 %v899, 16
        %v1174 = vshll.u32 %v899, 16
        %v1176 = vrot.slane %v1174, 1
        %v1177 = vor.u32 %v1172, %v1176
        %v1179 = vshll.u32 %v1012, 16
        %v1181 = vrot.slane %v1179, 1
        %v1182 = vsel %vm398, %v1177, %v1181
        %v1184 = vshrl.u32 %v900, 16
        %v1186 = vshll.u32 %v900, 16
        %v1188 = vrot.slane %v1186, 1
        %v1189 = vor.u32 %v1184, %v1188
        %v1191 = vshll.u32 %v1013, 16
        %v1193 = vrot.slane %v1191, 1
        %v1194 = vsel %vm398, %v1189, %v1193
        %v1196 = vshrl.u32 %v901, 16
        %v1198 = vshll.u32 %v901, 16
        %v1200 = vrot.slane %v1198, 1
        %v1201 = vor.u32 %v1196, %v1200
        %v1203 = vshll.u32 %v1014, 16
        %v1205 = vrot.slane %v1203, 1
        %v1206 = vsel %vm398, %v1201, %v1205
        %1207 = vrot.lane.b32.xlu0 %v1026, 16
        %v1208 = vpop.permute.xlu0 %1207
        %1209 = vrot.lane.b32.xlu0 %v1038, 16
        %v1210 = vpop.permute.xlu0 %1209
        %1211 = vrot.lane.b32.xlu0 %v1050, 16
        %v1212 = vpop.permute.xlu0 %1211
        %1213 = vrot.lane.b32.xlu0 %v1062, 16
        %v1214 = vpop.permute.xlu0 %1213
        %1215 = vrot.lane.b32.xlu0 %v1074, 16
        %v1216 = vpop.permute.xlu0 %1215
        %1217 = vrot.lane.b32.xlu0 %v1086, 16
        %v1218 = vpop.permute.xlu0 %1217
        %1219 = vrot.lane.b32.xlu0 %v1098, 16
        %v1220 = vpop.permute.xlu0 %1219
        %1221 = vrot.lane.b32.xlu0 %v1110, 16
        %v1222 = vpop.permute.xlu0 %1221
        %1223 = vrot.lane.b32.xlu0 %v1122, 16
        %v1224 = vpop.permute.xlu0 %1223
        %1225 = vrot.lane.b32.xlu0 %v1134, 16
        %v1226 = vpop.permute.xlu0 %1225
        %1227 = vrot.lane.b32.xlu0 %v1146, 16
        %v1228 = vpop.permute.xlu0 %1227
        %1229 = vrot.lane.b32.xlu0 %v1158, 16
        %v1230 = vpop.permute.xlu0 %1229
        %1231 = vrot.lane.b32.xlu0 %v1170, 16
        %v1232 = vpop.permute.xlu0 %1231
        %1233 = vrot.lane.b32.xlu0 %v1182, 16
        %v1234 = vpop.permute.xlu0 %1233
        %1235 = vrot.lane.b32.xlu0 %v1194, 16
        %v1236 = vpop.permute.xlu0 %1235
        %1237 = vrot.lane.b32.xlu0 %v1206, 16
        %v1238 = vpop.permute.xlu0 %1237
        %vm1255 = vcmask 162944
        %1256 = vst.msk [vmem:[#allocation2] sm:$0xff] %vm1255, %v1208
        %1257 = vst.msk [vmem:[#allocation2 + $0x8] sm:$0xff] %vm1255, %v1210
        %1258 = vst.msk [vmem:[#allocation2 + $0x10] sm:$0xff] %vm1255, %v1212
        %1259 = vst.msk [vmem:[#allocation2 + $0x18] sm:$0xff] %vm1255, %v1214
        %1260 = vst.msk [vmem:[#allocation2 + $0x20] sm:$0xff] %vm1255, %v1216
        %1261 = vst.msk [vmem:[#allocation2 + $0x28] sm:$0xff] %vm1255, %v1218
        %1262 = vst.msk [vmem:[#allocation2 + $0x30] sm:$0xff] %vm1255, %v1220
        %1263 = vst.msk [vmem:[#allocation2 + $0x38] sm:$0xff] %vm1255, %v1222
        %1264 = vst.msk [vmem:[#allocation2 + $0x40] sm:$0xff] %vm1255, %v1224
        %1265 = vst.msk [vmem:[#allocation2 + $0x48] sm:$0xff] %vm1255, %v1226
        %1266 = vst.msk [vmem:[#allocation2 + $0x50] sm:$0xff] %vm1255, %v1228
        %1267 = vst.msk [vmem:[#allocation2 + $0x58] sm:$0xff] %vm1255, %v1230
        %1268 = vst.msk [vmem:[#allocation2 + $0x60] sm:$0xff] %vm1255, %v1232
        %1269 = vst.msk [vmem:[#allocation2 + $0x68] sm:$0xff] %vm1255, %v1234
        %1270 = vst.msk [vmem:[#allocation2 + $0x70] sm:$0xff] %vm1255, %v1236
        %1271 = vst.msk [vmem:[#allocation2 + $0x78] sm:$0xff] %vm1255, %v1238
        %v1272 = vrot.slane %v886, 1
        %v1273 = vrot.slane %v999, 1
        %v1274 = vsel %vm656, %v1272, %v1273
        %v1275 = vrot.slane %v887, 1
        %v1276 = vrot.slane %v1000, 1
        %v1277 = vsel %vm656, %v1275, %v1276
        %v1278 = vrot.slane %v888, 1
        %v1279 = vrot.slane %v1001, 1
        %v1280 = vsel %vm656, %v1278, %v1279
        %v1281 = vrot.slane %v889, 1
        %v1282 = vrot.slane %v1002, 1
        %v1283 = vsel %vm656, %v1281, %v1282
        %v1284 = vrot.slane %v890, 1
        %v1285 = vrot.slane %v1003, 1
        %v1286 = vsel %vm656, %v1284, %v1285
        %v1287 = vrot.slane %v891, 1
        %v1288 = vrot.slane %v1004, 1
        %v1289 = vsel %vm656, %v1287, %v1288
        %v1290 = vrot.slane %v892, 1
        %v1291 = vrot.slane %v1005, 1
        %v1292 = vsel %vm656, %v1290, %v1291
        %v1293 = vrot.slane %v893, 1
        %v1294 = vrot.slane %v1006, 1
        %v1295 = vsel %vm656, %v1293, %v1294
        %v1296 = vrot.slane %v894, 1
        %v1297 = vrot.slane %v1007, 1
        %v1298 = vsel %vm656, %v1296, %v1297
        %v1299 = vrot.slane %v895, 1
        %v1300 = vrot.slane %v1008, 1
        %v1301 = vsel %vm656, %v1299, %v1300
        %v1302 = vrot.slane %v896, 1
        %v1303 = vrot.slane %v1009, 1
        %v1304 = vsel %vm656, %v1302, %v1303
        %v1305 = vrot.slane %v897, 1
        %v1306 = vrot.slane %v1010, 1
        %v1307 = vsel %vm656, %v1305, %v1306
        %v1308 = vrot.slane %v898, 1
        %v1309 = vrot.slane %v1011, 1
        %v1310 = vsel %vm656, %v1308, %v1309
        %v1311 = vrot.slane %v899, 1
        %v1312 = vrot.slane %v1012, 1
        %v1313 = vsel %vm656, %v1311, %v1312
        %v1314 = vrot.slane %v900, 1
        %v1315 = vrot.slane %v1013, 1
        %v1316 = vsel %vm656, %v1314, %v1315
        %v1317 = vrot.slane %v901, 1
        %v1318 = vrot.slane %v1014, 1
        %v1319 = vsel %vm656, %v1317, %v1318
        %1320 = vrot.lane.b32.xlu0 %v1274, 20
        %v1321 = vpop.permute.xlu0 %1320
        %1322 = vrot.lane.b32.xlu0 %v1277, 20
        %v1323 = vpop.permute.xlu0 %1322
        %1324 = vrot.lane.b32.xlu0 %v1280, 20
        %v1325 = vpop.permute.xlu0 %1324
        %1326 = vrot.lane.b32.xlu0 %v1283, 20
        %v1327 = vpop.permute.xlu0 %1326
        %1328 = vrot.lane.b32.xlu0 %v1286, 20
        %v1329 = vpop.permute.xlu0 %1328
        %1330 = vrot.lane.b32.xlu0 %v1289, 20
        %v1331 = vpop.permute.xlu0 %1330
        %1332 = vrot.lane.b32.xlu0 %v1292, 20
        %v1333 = vpop.permute.xlu0 %1332
        %1334 = vrot.lane.b32.xlu0 %v1295, 20
        %v1335 = vpop.permute.xlu0 %1334
        %1336 = vrot.lane.b32.xlu0 %v1298, 20
        %v1337 = vpop.permute.xlu0 %1336
        %1338 = vrot.lane.b32.xlu0 %v1301, 20
        %v1339 = vpop.permute.xlu0 %1338
        %1340 = vrot.lane.b32.xlu0 %v1304, 20
        %v1341 = vpop.permute.xlu0 %1340
        %1342 = vrot.lane.b32.xlu0 %v1307, 20
        %v1343 = vpop.permute.xlu0 %1342
        %1344 = vrot.lane.b32.xlu0 %v1310, 20
        %v1345 = vpop.permute.xlu0 %1344
        %1346 = vrot.lane.b32.xlu0 %v1313, 20
        %v1347 = vpop.permute.xlu0 %1346
        %1348 = vrot.lane.b32.xlu0 %v1316, 20
        %v1349 = vpop.permute.xlu0 %1348
        %1350 = vrot.lane.b32.xlu0 %v1319, 20
        %v1351 = vpop.permute.xlu0 %1350
        %vm1368 = vcmask 195744
        %1369 = vst.msk [vmem:[#allocation2] sm:$0xff] %vm1368, %v1321
        %1370 = vst.msk [vmem:[#allocation2 + $0x8] sm:$0xff] %vm1368, %v1323
        %1371 = vst.msk [vmem:[#allocation2 + $0x10] sm:$0xff] %vm1368, %v1325
        %1372 = vst.msk [vmem:[#allocation2 + $0x18] sm:$0xff] %vm1368, %v1327
        %1373 = vst.msk [vmem:[#allocation2 + $0x20] sm:$0xff] %vm1368, %v1329
        %1374 = vst.msk [vmem:[#allocation2 + $0x28] sm:$0xff] %vm1368, %v1331
        %1375 = vst.msk [vmem:[#allocation2 + $0x30] sm:$0xff] %vm1368, %v1333
        %1376 = vst.msk [vmem:[#allocation2 + $0x38] sm:$0xff] %vm1368, %v1335
        %1377 = vst.msk [vmem:[#allocation2 + $0x40] sm:$0xff] %vm1368, %v1337
        %1378 = vst.msk [vmem:[#allocation2 + $0x48] sm:$0xff] %vm1368, %v1339
        %1379 = vst.msk [vmem:[#allocation2 + $0x50] sm:$0xff] %vm1368, %v1341
        %1380 = vst.msk [vmem:[#allocation2 + $0x58] sm:$0xff] %vm1368, %v1343
        %1381 = vst.msk [vmem:[#allocation2 + $0x60] sm:$0xff] %vm1368, %v1345
        %1382 = vst.msk [vmem:[#allocation2 + $0x68] sm:$0xff] %vm1368, %v1347
        %1383 = vst.msk [vmem:[#allocation2 + $0x70] sm:$0xff] %vm1368, %v1349
        %1384 = vst.msk [vmem:[#allocation2 + $0x78] sm:$0xff] %vm1368, %v1351
        %s1385 = sadd.s32 %s185, 2
        %s1386 = smul.u32 %s1385, 3
        %s1387 = smul.addr %s1386, 4
        %s1388 = scalar_lea.vmem %s182, %s1387
        %v1389 = vld [vmem:[%s1388] sm:$0xf]
        %v1390 = vld [vmem:[%s1388 + $0x4] sm:$0xf]
        %v1391 = vld [vmem:[%s1388 + $0x8] sm:$0x1]
        %v1392 = vld [vmem:[%s1388 + $0xc] sm:$0xf]
        %v1393 = vld [vmem:[%s1388 + $0x10] sm:$0xf]
        %v1394 = vld [vmem:[%s1388 + $0x14] sm:$0x1]
        %v1395 = vld [vmem:[%s1388 + $0x18] sm:$0xf]
        %v1396 = vld [vmem:[%s1388 + $0x1c] sm:$0xf]
        %v1397 = vld [vmem:[%s1388 + $0x20] sm:$0x1]
        %v1398 = vld [vmem:[%s1388 + $0x24] sm:$0xf]
        %v1399 = vld [vmem:[%s1388 + $0x28] sm:$0xf]
        %v1400 = vld [vmem:[%s1388 + $0x2c] sm:$0x1]
        %v1401 = vld [vmem:[%s1388 + $0x30] sm:$0xf]
        %v1402 = vld [vmem:[%s1388 + $0x34] sm:$0xf]
        %v1403 = vld [vmem:[%s1388 + $0x38] sm:$0x1]
        %v1404 = vld [vmem:[%s1388 + $0x3c] sm:$0xf]
        %v1405 = vld [vmem:[%s1388 + $0x40] sm:$0xf]
        %v1406 = vld [vmem:[%s1388 + $0x44] sm:$0x1]
        %v1407 = vld [vmem:[%s1388 + $0x48] sm:$0xf]
        %v1408 = vld [vmem:[%s1388 + $0x4c] sm:$0xf]
        %v1409 = vld [vmem:[%s1388 + $0x50] sm:$0x1]
        %v1410 = vld [vmem:[%s1388 + $0x54] sm:$0xf]
        %v1411 = vld [vmem:[%s1388 + $0x58] sm:$0xf]
        %v1412 = vld [vmem:[%s1388 + $0x5c] sm:$0x1]
        %v1413 = vld [vmem:[%s1388 + $0x60] sm:$0xf]
        %v1414 = vld [vmem:[%s1388 + $0x64] sm:$0xf]
        %v1415 = vld [vmem:[%s1388 + $0x68] sm:$0x1]
        %v1416 = vld [vmem:[%s1388 + $0x6c] sm:$0xf]
        %v1417 = vld [vmem:[%s1388 + $0x70] sm:$0xf]
        %v1418 = vld [vmem:[%s1388 + $0x74] sm:$0x1]
        %v1419 = vld [vmem:[%s1388 + $0x78] sm:$0xf]
        %v1420 = vld [vmem:[%s1388 + $0x7c] sm:$0xf]
        %v1421 = vld [vmem:[%s1388 + $0x80] sm:$0x1]
        %v1422 = vld [vmem:[%s1388 + $0x84] sm:$0xf]
        %v1423 = vld [vmem:[%s1388 + $0x88] sm:$0xf]
        %v1424 = vld [vmem:[%s1388 + $0x8c] sm:$0x1]
        %v1425 = vld [vmem:[%s1388 + $0x90] sm:$0xf]
        %v1426 = vld [vmem:[%s1388 + $0x94] sm:$0xf]
        %v1427 = vld [vmem:[%s1388 + $0x98] sm:$0x1]
        %v1428 = vld [vmem:[%s1388 + $0x9c] sm:$0xf]
        %v1429 = vld [vmem:[%s1388 + $0xa0] sm:$0xf]
        %v1430 = vld [vmem:[%s1388 + $0xa4] sm:$0x1]
        %v1431 = vld [vmem:[%s1388 + $0xa8] sm:$0xf]
        %v1432 = vld [vmem:[%s1388 + $0xac] sm:$0xf]
        %v1433 = vld [vmem:[%s1388 + $0xb0] sm:$0x1]
        %v1434 = vld [vmem:[%s1388 + $0xb4] sm:$0xf]
        %v1435 = vld [vmem:[%s1388 + $0xb8] sm:$0xf]
        %v1436 = vld [vmem:[%s1388 + $0xbc] sm:$0x1]
        %v1469 = vunpack.c.l.b16 %v1389
        %v1470 = vunpack.c.l.b16 %v1390
        %v1471 = vunpack.c.l.b16 %v1392
        %v1472 = vunpack.c.l.b16 %v1393
        %v1473 = vunpack.c.l.b16 %v1395
        %v1474 = vunpack.c.l.b16 %v1396
        %v1475 = vunpack.c.l.b16 %v1398
        %v1476 = vunpack.c.l.b16 %v1399
        %v1477 = vunpack.c.l.b16 %v1401
        %v1478 = vunpack.c.l.b16 %v1402
        %v1479 = vunpack.c.l.b16 %v1404
        %v1480 = vunpack.c.l.b16 %v1405
        %v1481 = vunpack.c.l.b16 %v1407
        %v1482 = vunpack.c.l.b16 %v1408
        %v1483 = vunpack.c.l.b16 %v1410
        %v1484 = vunpack.c.l.b16 %v1411
        %v1485 = vunpack.c.l.b16 %v1413
        %v1486 = vunpack.c.l.b16 %v1414
        %v1487 = vunpack.c.l.b16 %v1416
        %v1488 = vunpack.c.l.b16 %v1417
        %v1489 = vunpack.c.l.b16 %v1419
        %v1490 = vunpack.c.l.b16 %v1420
        %v1491 = vunpack.c.l.b16 %v1422
        %v1492 = vunpack.c.l.b16 %v1423
        %v1493 = vunpack.c.l.b16 %v1425
        %v1494 = vunpack.c.l.b16 %v1426
        %v1495 = vunpack.c.l.b16 %v1428
        %v1496 = vunpack.c.l.b16 %v1429
        %v1497 = vunpack.c.l.b16 %v1431
        %v1498 = vunpack.c.l.b16 %v1432
        %v1499 = vunpack.c.l.b16 %v1434
        %v1500 = vunpack.c.l.b16 %v1435
        %v1501 = vpack.c.b16 %v1470, %v1469
        %v1502 = vpack.c.b16 %v1472, %v1471
        %v1503 = vpack.c.b16 %v1474, %v1473
        %v1504 = vpack.c.b16 %v1476, %v1475
        %v1505 = vpack.c.b16 %v1478, %v1477
        %v1506 = vpack.c.b16 %v1480, %v1479
        %v1507 = vpack.c.b16 %v1482, %v1481
        %v1508 = vpack.c.b16 %v1484, %v1483
        %v1509 = vpack.c.b16 %v1486, %v1485
        %v1510 = vpack.c.b16 %v1488, %v1487
        %v1511 = vpack.c.b16 %v1490, %v1489
        %v1512 = vpack.c.b16 %v1492, %v1491
        %v1513 = vpack.c.b16 %v1494, %v1493
        %v1514 = vpack.c.b16 %v1496, %v1495
        %v1515 = vpack.c.b16 %v1498, %v1497
        %v1516 = vpack.c.b16 %v1500, %v1499
        %1517 = vrot.lane.b32.xlu0 %v1501, 24
        %v1518 = vpop.permute.xlu0 %1517
        %1519 = vrot.lane.b32.xlu0 %v1502, 24
        %v1520 = vpop.permute.xlu0 %1519
        %1521 = vrot.lane.b32.xlu0 %v1503, 24
        %v1522 = vpop.permute.xlu0 %1521
        %1523 = vrot.lane.b32.xlu0 %v1504, 24
        %v1524 = vpop.permute.xlu0 %1523
        %1525 = vrot.lane.b32.xlu0 %v1505, 24
        %v1526 = vpop.permute.xlu0 %1525
        %1527 = vrot.lane.b32.xlu0 %v1506, 24
        %v1528 = vpop.permute.xlu0 %1527
        %1529 = vrot.lane.b32.xlu0 %v1507, 24
        %v1530 = vpop.permute.xlu0 %1529
        %1531 = vrot.lane.b32.xlu0 %v1508, 24
        %v1532 = vpop.permute.xlu0 %1531
        %1533 = vrot.lane.b32.xlu0 %v1509, 24
        %v1534 = vpop.permute.xlu0 %1533
        %1535 = vrot.lane.b32.xlu0 %v1510, 24
        %v1536 = vpop.permute.xlu0 %1535
        %1537 = vrot.lane.b32.xlu0 %v1511, 24
        %v1538 = vpop.permute.xlu0 %1537
        %1539 = vrot.lane.b32.xlu0 %v1512, 24
        %v1540 = vpop.permute.xlu0 %1539
        %1541 = vrot.lane.b32.xlu0 %v1513, 24
        %v1542 = vpop.permute.xlu0 %1541
        %1543 = vrot.lane.b32.xlu0 %v1514, 24
        %v1544 = vpop.permute.xlu0 %1543
        %1545 = vrot.lane.b32.xlu0 %v1515, 24
        %v1546 = vpop.permute.xlu0 %1545
        %1547 = vrot.lane.b32.xlu0 %v1516, 24
        %v1548 = vpop.permute.xlu0 %1547
        %vm1565 = vcmask 228544
        %1566 = vst.msk [vmem:[#allocation2] sm:$0xff] %vm1565, %v1518
        %1567 = vst.msk [vmem:[#allocation2 + $0x8] sm:$0xff] %vm1565, %v1520
        %1568 = vst.msk [vmem:[#allocation2 + $0x10] sm:$0xff] %vm1565, %v1522
        %1569 = vst.msk [vmem:[#allocation2 + $0x18] sm:$0xff] %vm1565, %v1524
        %1570 = vst.msk [vmem:[#allocation2 + $0x20] sm:$0xff] %vm1565, %v1526
        %1571 = vst.msk [vmem:[#allocation2 + $0x28] sm:$0xff] %vm1565, %v1528
        %1572 = vst.msk [vmem:[#allocation2 + $0x30] sm:$0xff] %vm1565, %v1530
        %1573 = vst.msk [vmem:[#allocation2 + $0x38] sm:$0xff] %vm1565, %v1532
        %1574 = vst.msk [vmem:[#allocation2 + $0x40] sm:$0xff] %vm1565, %v1534
        %1575 = vst.msk [vmem:[#allocation2 + $0x48] sm:$0xff] %vm1565, %v1536
        %1576 = vst.msk [vmem:[#allocation2 + $0x50] sm:$0xff] %vm1565, %v1538
        %1577 = vst.msk [vmem:[#allocation2 + $0x58] sm:$0xff] %vm1565, %v1540
        %1578 = vst.msk [vmem:[#allocation2 + $0x60] sm:$0xff] %vm1565, %v1542
        %1579 = vst.msk [vmem:[#allocation2 + $0x68] sm:$0xff] %vm1565, %v1544
        %1580 = vst.msk [vmem:[#allocation2 + $0x70] sm:$0xff] %vm1565, %v1546
        %1581 = vst.msk [vmem:[#allocation2 + $0x78] sm:$0xff] %vm1565, %v1548
        %v1598 = vunpack.c.l.b16 %v1391
        %v1599 = vunpack.c.l.b16 %v1394
        %v1600 = vunpack.c.l.b16 %v1397
        %v1601 = vunpack.c.l.b16 %v1400
        %v1602 = vunpack.c.l.b16 %v1403
        %v1603 = vunpack.c.l.b16 %v1406
        %v1604 = vunpack.c.l.b16 %v1409
        %v1605 = vunpack.c.l.b16 %v1412
        %v1606 = vunpack.c.l.b16 %v1415
        %v1607 = vunpack.c.l.b16 %v1418
        %v1608 = vunpack.c.l.b16 %v1421
        %v1609 = vunpack.c.l.b16 %v1424
        %v1610 = vunpack.c.l.b16 %v1427
        %v1611 = vunpack.c.l.b16 %v1430
        %v1612 = vunpack.c.l.b16 %v1433
        %v1613 = vunpack.c.l.b16 %v1436
        %v1614 = vpack.c.b16 %v1598, %v1598
        %v1615 = vpack.c.b16 %v1599, %v1599
        %v1616 = vpack.c.b16 %v1600, %v1600
        %v1617 = vpack.c.b16 %v1601, %v1601
        %v1618 = vpack.c.b16 %v1602, %v1602
        %v1619 = vpack.c.b16 %v1603, %v1603
        %v1620 = vpack.c.b16 %v1604, %v1604
        %v1621 = vpack.c.b16 %v1605, %v1605
        %v1622 = vpack.c.b16 %v1606, %v1606
        %v1623 = vpack.c.b16 %v1607, %v1607
        %v1624 = vpack.c.b16 %v1608, %v1608
        %v1625 = vpack.c.b16 %v1609, %v1609
        %v1626 = vpack.c.b16 %v1610, %v1610
        %v1627 = vpack.c.b16 %v1611, %v1611
        %v1628 = vpack.c.b16 %v1612, %v1612
        %v1629 = vpack.c.b16 %v1613, %v1613
        %v1631 = vshrl.u32 %v1501, 16
        %v1633 = vshll.u32 %v1501, 16
        %v1635 = vrot.slane %v1633, 1
        %v1636 = vor.u32 %v1631, %v1635
        %v1638 = vshll.u32 %v1614, 16
        %v1640 = vrot.slane %v1638, 1
        %v1641 = vsel %vm398, %v1636, %v1640
        %v1643 = vshrl.u32 %v1502, 16
        %v1645 = vshll.u32 %v1502, 16
        %v1647 = vrot.slane %v1645, 1
        %v1648 = vor.u32 %v1643, %v1647
        %v1650 = vshll.u32 %v1615, 16
        %v1652 = vrot.slane %v1650, 1
        %v1653 = vsel %vm398, %v1648, %v1652
        %v1655 = vshrl.u32 %v1503, 16
        %v1657 = vshll.u32 %v1503, 16
        %v1659 = vrot.slane %v1657, 1
        %v1660 = vor.u32 %v1655, %v1659
        %v1662 = vshll.u32 %v1616, 16
        %v1664 = vrot.slane %v1662, 1
        %v1665 = vsel %vm398, %v1660, %v1664
        %v1667 = vshrl.u32 %v1504, 16
        %v1669 = vshll.u32 %v1504, 16
        %v1671 = vrot.slane %v1669, 1
        %v1672 = vor.u32 %v1667, %v1671
        %v1674 = vshll.u32 %v1617, 16
        %v1676 = vrot.slane %v1674, 1
        %v1677 = vsel %vm398, %v1672, %v1676
        %v1679 = vshrl.u32 %v1505, 16
        %v1681 = vshll.u32 %v1505, 16
        %v1683 = vrot.slane %v1681, 1
        %v1684 = vor.u32 %v1679, %v1683
        %v1686 = vshll.u32 %v1618, 16
        %v1688 = vrot.slane %v1686, 1
        %v1689 = vsel %vm398, %v1684, %v1688
        %v1691 = vshrl.u32 %v1506, 16
        %v1693 = vshll.u32 %v1506, 16
        %v1695 = vrot.slane %v1693, 1
        %v1696 = vor.u32 %v1691, %v1695
        %v1698 = vshll.u32 %v1619, 16
        %v1700 = vrot.slane %v1698, 1
        %v1701 = vsel %vm398, %v1696, %v1700
        %v1703 = vshrl.u32 %v1507, 16
        %v1705 = vshll.u32 %v1507, 16
        %v1707 = vrot.slane %v1705, 1
        %v1708 = vor.u32 %v1703, %v1707
        %v1710 = vshll.u32 %v1620, 16
        %v1712 = vrot.slane %v1710, 1
        %v1713 = vsel %vm398, %v1708, %v1712
        %v1715 = vshrl.u32 %v1508, 16
        %v1717 = vshll.u32 %v1508, 16
        %v1719 = vrot.slane %v1717, 1
        %v1720 = vor.u32 %v1715, %v1719
        %v1722 = vshll.u32 %v1621, 16
        %v1724 = vrot.slane %v1722, 1
        %v1725 = vsel %vm398, %v1720, %v1724
        %v1727 = vshrl.u32 %v1509, 16
        %v1729 = vshll.u32 %v1509, 16
        %v1731 = vrot.slane %v1729, 1
        %v1732 = vor.u32 %v1727, %v1731
        %v1734 = vshll.u32 %v1622, 16
        %v1736 = vrot.slane %v1734, 1
        %v1737 = vsel %vm398, %v1732, %v1736
        %v1739 = vshrl.u32 %v1510, 16
        %v1741 = vshll.u32 %v1510, 16
        %v1743 = vrot.slane %v1741, 1
        %v1744 = vor.u32 %v1739, %v1743
        %v1746 = vshll.u32 %v1623, 16
        %v1748 = vrot.slane %v1746, 1
        %v1749 = vsel %vm398, %v1744, %v1748
        %v1751 = vshrl.u32 %v1511, 16
        %v1753 = vshll.u32 %v1511, 16
        %v1755 = vrot.slane %v1753, 1
        %v1756 = vor.u32 %v1751, %v1755
        %v1758 = vshll.u32 %v1624, 16
        %v1760 = vrot.slane %v1758, 1
        %v1761 = vsel %vm398, %v1756, %v1760
        %v1763 = vshrl.u32 %v1512, 16
        %v1765 = vshll.u32 %v1512, 16
        %v1767 = vrot.slane %v1765, 1
        %v1768 = vor.u32 %v1763, %v1767
        %v1770 = vshll.u32 %v1625, 16
        %v1772 = vrot.slane %v1770, 1
        %v1773 = vsel %vm398, %v1768, %v1772
        %v1775 = vshrl.u32 %v1513, 16
        %v1777 = vshll.u32 %v1513, 16
        %v1779 = vrot.slane %v1777, 1
        %v1780 = vor.u32 %v1775, %v1779
        %v1782 = vshll.u32 %v1626, 16
        %v1784 = vrot.slane %v1782, 1
        %v1785 = vsel %vm398, %v1780, %v1784
        %v1787 = vshrl.u32 %v1514, 16
        %v1789 = vshll.u32 %v1514, 16
        %v1791 = vrot.slane %v1789, 1
        %v1792 = vor.u32 %v1787, %v1791
        %v1794 = vshll.u32 %v1627, 16
        %v1796 = vrot.slane %v1794, 1
        %v1797 = vsel %vm398, %v1792, %v1796
        %v1799 = vshrl.u32 %v1515, 16
        %v1801 = vshll.u32 %v1515, 16
        %v1803 = vrot.slane %v1801, 1
        %v1804 = vor.u32 %v1799, %v1803
        %v1806 = vshll.u32 %v1628, 16
        %v1808 = vrot.slane %v1806, 1
        %v1809 = vsel %vm398, %v1804, %v1808
        %v1811 = vshrl.u32 %v1516, 16
        %v1813 = vshll.u32 %v1516, 16
        %v1815 = vrot.slane %v1813, 1
        %v1816 = vor.u32 %v1811, %v1815
        %v1818 = vshll.u32 %v1629, 16
        %v1820 = vrot.slane %v1818, 1
        %v1821 = vsel %vm398, %v1816, %v1820
        %1822 = vrot.lane.b32.xlu0 %v1641, 28
        %v1823 = vpop.permute.xlu0 %1822
        %1824 = vrot.lane.b32.xlu0 %v1653, 28
        %v1825 = vpop.permute.xlu0 %1824
        %1826 = vrot.lane.b32.xlu0 %v1665, 28
        %v1827 = vpop.permute.xlu0 %1826
        %1828 = vrot.lane.b32.xlu0 %v1677, 28
        %v1829 = vpop.permute.xlu0 %1828
        %1830 = vrot.lane.b32.xlu0 %v1689, 28
        %v1831 = vpop.permute.xlu0 %1830
        %1832 = vrot.lane.b32.xlu0 %v1701, 28
        %v1833 = vpop.permute.xlu0 %1832
        %1834 = vrot.lane.b32.xlu0 %v1713, 28
        %v1835 = vpop.permute.xlu0 %1834
        %1836 = vrot.lane.b32.xlu0 %v1725, 28
        %v1837 = vpop.permute.xlu0 %1836
        %1838 = vrot.lane.b32.xlu0 %v1737, 28
        %v1839 = vpop.permute.xlu0 %1838
        %1840 = vrot.lane.b32.xlu0 %v1749, 28
        %v1841 = vpop.permute.xlu0 %1840
        %1842 = vrot.lane.b32.xlu0 %v1761, 28
        %v1843 = vpop.permute.xlu0 %1842
        %1844 = vrot.lane.b32.xlu0 %v1773, 28
        %v1845 = vpop.permute.xlu0 %1844
        %1846 = vrot.lane.b32.xlu0 %v1785, 28
        %v1847 = vpop.permute.xlu0 %1846
        %1848 = vrot.lane.b32.xlu0 %v1797, 28
        %v1849 = vpop.permute.xlu0 %1848
        %1850 = vrot.lane.b32.xlu0 %v1809, 28
        %v1851 = vpop.permute.xlu0 %1850
        %1852 = vrot.lane.b32.xlu0 %v1821, 28
        %v1853 = vpop.permute.xlu0 %1852
        %vm1870 = vcmask 261344
        %1871 = vst.msk [vmem:[#allocation2] sm:$0xff] %vm1870, %v1823
        %1872 = vst.msk [vmem:[#allocation2 + $0x8] sm:$0xff] %vm1870, %v1825
        %1873 = vst.msk [vmem:[#allocation2 + $0x10] sm:$0xff] %vm1870, %v1827
        %1874 = vst.msk [vmem:[#allocation2 + $0x18] sm:$0xff] %vm1870, %v1829
        %1875 = vst.msk [vmem:[#allocation2 + $0x20] sm:$0xff] %vm1870, %v1831
        %1876 = vst.msk [vmem:[#allocation2 + $0x28] sm:$0xff] %vm1870, %v1833
        %1877 = vst.msk [vmem:[#allocation2 + $0x30] sm:$0xff] %vm1870, %v1835
        %1878 = vst.msk [vmem:[#allocation2 + $0x38] sm:$0xff] %vm1870, %v1837
        %1879 = vst.msk [vmem:[#allocation2 + $0x40] sm:$0xff] %vm1870, %v1839
        %1880 = vst.msk [vmem:[#allocation2 + $0x48] sm:$0xff] %vm1870, %v1841
        %1881 = vst.msk [vmem:[#allocation2 + $0x50] sm:$0xff] %vm1870, %v1843
        %1882 = vst.msk [vmem:[#allocation2 + $0x58] sm:$0xff] %vm1870, %v1845
        %1883 = vst.msk [vmem:[#allocation2 + $0x60] sm:$0xff] %vm1870, %v1847
        %1884 = vst.msk [vmem:[#allocation2 + $0x68] sm:$0xff] %vm1870, %v1849
        %1885 = vst.msk [vmem:[#allocation2 + $0x70] sm:$0xff] %vm1870, %v1851
        %1886 = vst.msk [vmem:[#allocation2 + $0x78] sm:$0xff] %vm1870, %v1853
        %v1887 = vrot.slane %v1501, 1
        %v1888 = vrot.slane %v1614, 1
        %v1889 = vsel %vm656, %v1887, %v1888
        %v1890 = vrot.slane %v1502, 1
        %v1891 = vrot.slane %v1615, 1
        %v1892 = vsel %vm656, %v1890, %v1891
        %v1893 = vrot.slane %v1503, 1
        %v1894 = vrot.slane %v1616, 1
        %v1895 = vsel %vm656, %v1893, %v1894
        %v1896 = vrot.slane %v1504, 1
        %v1897 = vrot.slane %v1617, 1
        %v1898 = vsel %vm656, %v1896, %v1897
        %v1899 = vrot.slane %v1505, 1
        %v1900 = vrot.slane %v1618, 1
        %v1901 = vsel %vm656, %v1899, %v1900
        %v1902 = vrot.slane %v1506, 1
        %v1903 = vrot.slane %v1619, 1
        %v1904 = vsel %vm656, %v1902, %v1903
        %v1905 = vrot.slane %v1507, 1
        %v1906 = vrot.slane %v1620, 1
        %v1907 = vsel %vm656, %v1905, %v1906
        %v1908 = vrot.slane %v1508, 1
        %v1909 = vrot.slane %v1621, 1
        %v1910 = vsel %vm656, %v1908, %v1909
        %v1911 = vrot.slane %v1509, 1
        %v1912 = vrot.slane %v1622, 1
        %v1913 = vsel %vm656, %v1911, %v1912
        %v1914 = vrot.slane %v1510, 1
        %v1915 = vrot.slane %v1623, 1
        %v1916 = vsel %vm656, %v1914, %v1915
        %v1917 = vrot.slane %v1511, 1
        %v1918 = vrot.slane %v1624, 1
        %v1919 = vsel %vm656, %v1917, %v1918
        %v1920 = vrot.slane %v1512, 1
        %v1921 = vrot.slane %v1625, 1
        %v1922 = vsel %vm656, %v1920, %v1921
        %v1923 = vrot.slane %v1513, 1
        %v1924 = vrot.slane %v1626, 1
        %v1925 = vsel %vm656, %v1923, %v1924
        %v1926 = vrot.slane %v1514, 1
        %v1927 = vrot.slane %v1627, 1
        %v1928 = vsel %vm656, %v1926, %v1927
        %v1929 = vrot.slane %v1515, 1
        %v1930 = vrot.slane %v1628, 1
        %v1931 = vsel %vm656, %v1929, %v1930
        %v1932 = vrot.slane %v1516, 1
        %v1933 = vrot.slane %v1629, 1
        %v1934 = vsel %vm656, %v1932, %v1933
        %1935 = vrot.lane.b32.xlu0 %v1889, 32
        %v1936 = vpop.permute.xlu0 %1935
        %1937 = vrot.lane.b32.xlu0 %v1892, 32
        %v1938 = vpop.permute.xlu0 %1937
        %1939 = vrot.lane.b32.xlu0 %v1895, 32
        %v1940 = vpop.permute.xlu0 %1939
        %1941 = vrot.lane.b32.xlu0 %v1898, 32
        %v1942 = vpop.permute.xlu0 %1941
        %1943 = vrot.lane.b32.xlu0 %v1901, 32
        %v1944 = vpop.permute.xlu0 %1943
        %1945 = vrot.lane.b32.xlu0 %v1904, 32
        %v1946 = vpop.permute.xlu0 %1945
        %1947 = vrot.lane.b32.xlu0 %v1907, 32
        %v1948 = vpop.permute.xlu0 %1947
        %1949 = vrot.lane.b32.xlu0 %v1910, 32
        %v1950 = vpop.permute.xlu0 %1949
        %1951 = vrot.lane.b32.xlu0 %v1913, 32
        %v1952 = vpop.permute.xlu0 %1951
        %1953 = vrot.lane.b32.xlu0 %v1916, 32
        %v1954 = vpop.permute.xlu0 %1953
        %1955 = vrot.lane.b32.xlu0 %v1919, 32
        %v1956 = vpop.permute.xlu0 %1955
        %1957 = vrot.lane.b32.xlu0 %v1922, 32
        %v1958 = vpop.permute.xlu0 %1957
        %1959 = vrot.lane.b32.xlu0 %v1925, 32
        %v1960 = vpop.permute.xlu0 %1959
        %1961 = vrot.lane.b32.xlu0 %v1928, 32
        %v1962 = vpop.permute.xlu0 %1961
        %1963 = vrot.lane.b32.xlu0 %v1931, 32
        %v1964 = vpop.permute.xlu0 %1963
        %1965 = vrot.lane.b32.xlu0 %v1934, 32
        %v1966 = vpop.permute.xlu0 %1965
        %vm1983 = vcmask 294144
        %1984 = vst.msk [vmem:[#allocation2] sm:$0xff] %vm1983, %v1936
        %1985 = vst.msk [vmem:[#allocation2 + $0x8] sm:$0xff] %vm1983, %v1938
        %1986 = vst.msk [vmem:[#allocation2 + $0x10] sm:$0xff] %vm1983, %v1940
        %1987 = vst.msk [vmem:[#allocation2 + $0x18] sm:$0xff] %vm1983, %v1942
        %1988 = vst.msk [vmem:[#allocation2 + $0x20] sm:$0xff] %vm1983, %v1944
        %1989 = vst.msk [vmem:[#allocation2 + $0x28] sm:$0xff] %vm1983, %v1946
        %1990 = vst.msk [vmem:[#allocation2 + $0x30] sm:$0xff] %vm1983, %v1948
        %1991 = vst.msk [vmem:[#allocation2 + $0x38] sm:$0xff] %vm1983, %v1950
        %1992 = vst.msk [vmem:[#allocation2 + $0x40] sm:$0xff] %vm1983, %v1952
        %1993 = vst.msk [vmem:[#allocation2 + $0x48] sm:$0xff] %vm1983, %v1954
        %1994 = vst.msk [vmem:[#allocation2 + $0x50] sm:$0xff] %vm1983, %v1956
        %1995 = vst.msk [vmem:[#allocation2 + $0x58] sm:$0xff] %vm1983, %v1958
        %1996 = vst.msk [vmem:[#allocation2 + $0x60] sm:$0xff] %vm1983, %v1960
        %1997 = vst.msk [vmem:[#allocation2 + $0x68] sm:$0xff] %vm1983, %v1962
        %1998 = vst.msk [vmem:[#allocation2 + $0x70] sm:$0xff] %vm1983, %v1964
        %1999 = vst.msk [vmem:[#allocation2 + $0x78] sm:$0xff] %vm1983, %v1966
        %v2000 = vld [vmem:[#allocation2] sm:$0xff]
        %v2001 = vld [vmem:[#allocation2 + $0x8] sm:$0xff]
        %v2002 = vld [vmem:[#allocation2 + $0x10] sm:$0xff]
        %v2003 = vld [vmem:[#allocation2 + $0x18] sm:$0xff]
        %v2004 = vld [vmem:[#allocation2 + $0x20] sm:$0xff]
        %v2005 = vld [vmem:[#allocation2 + $0x28] sm:$0xff]
        %v2006 = vld [vmem:[#allocation2 + $0x30] sm:$0xff]
        %v2007 = vld [vmem:[#allocation2 + $0x38] sm:$0xff]
        %v2008 = vld [vmem:[#allocation2 + $0x40] sm:$0xff]
        %v2009 = vld [vmem:[#allocation2 + $0x48] sm:$0xff]
        %v2010 = vld [vmem:[#allocation2 + $0x50] sm:$0xff]
        %v2011 = vld [vmem:[#allocation2 + $0x58] sm:$0xff]
        %v2012 = vld [vmem:[#allocation2 + $0x60] sm:$0xff]
        %v2013 = vld [vmem:[#allocation2 + $0x68] sm:$0xff]
        %v2014 = vld [vmem:[#allocation2 + $0x70] sm:$0xff]
        %v2015 = vld [vmem:[#allocation2 + $0x78] sm:$0xff]
        %v2016 = vld [vmem:[%s1] sm:$0xf]
        %v2017 = vld [vmem:[%s1 + $0x4] sm:$0xf]
        %v2018 = vld [vmem:[%s1 + $0x8] sm:$0xf]
        %v2019 = vld [vmem:[%s1 + $0xc] sm:$0xf]
        %v2020 = vld [vmem:[%s1 + $0x10] sm:$0x3]
        %v2021 = vld [vmem:[%s2] sm:$0x1]
        %v2023 = vlaneseq
        %v2024 = vshrl.u32 %v2023, 7
        %v2025 = vsub.s32 0, %v2024
        %v2026 = vrot.slane %v2021, %v2025
        %v2033 = vunpack.c.l.b16 %v2016
        %v2034 = vunpack.c.l.b16 %v2017
        %v2035 = vunpack.c.l.b16 %v2018
        %v2036 = vunpack.c.l.b16 %v2019
        %v2037 = vunpack.c.l.b16 %v2020
        %v2038 = vpack.c.b16 %v2034, %v2033
        %v2039 = vpack.c.b16 %v2036, %v2035
        %v2040 = vpack.c.b16 %v2037, %v2037
        %vm2043 = vcmask 293888
        %v2045 = vsel %vm2043, %v2000, 0
        %v2048 = vsel %vm2043, %v2001, 0
        %v2051 = vsel %vm2043, %v2002, 0
        %v2054 = vsel %vm2043, %v2003, 0
        %v2057 = vsel %vm2043, %v2004, 0
        %v2060 = vsel %vm2043, %v2005, 0
        %v2063 = vsel %vm2043, %v2006, 0
        %v2066 = vsel %vm2043, %v2007, 0
        %v2069 = vsel %vm2043, %v2008, 0
        %v2072 = vsel %vm2043, %v2009, 0
        %v2075 = vsel %vm2043, %v2010, 0
        %v2078 = vsel %vm2043, %v2011, 0
        %v2081 = vsel %vm2043, %v2012, 0
        %v2084 = vsel %vm2043, %v2013, 0
        %v2087 = vsel %vm2043, %v2014, 0
        %v2090 = vsel %vm2043, %v2015, 0
        %vm2092 = vcmask 1041408
        %v2094 = vsel %vm2092, %v2040, 0
        %2096 = vmatprep.subr.bf16.mxu0 0
        %2097 = vmatpush1.bf16.msra.mxu0 %v2038
        %2098 = vmatprep.subr.bf16.mxu0 0
        %2099 = vmatpush1.bf16.msra.mxu0 %v2039
        %2100 = vmatprep.subr.bf16.mxu0 0
        %2101 = vmatpush1.bf16.msra.mxu0 %v2094
        %2102 = vmatprep.subr.bf16.mxu0 0
        %2103 = vmatpush1.bf16.msra.mxu0 0
        %2104 = vmatprep.subr.bf16.mxu0 0
        %2105 = vmatpush1.bf16.msra.mxu0 0
        %2106 = vmatprep.subr.bf16.mxu0 0
        %2107 = vmatpush1.bf16.msra.mxu0 0
        %2108 = vmatprep.subr.bf16.mxu0 0
        %2109 = vmatpush1.bf16.msra.mxu0 0
        %2110 = vmatprep.subr.bf16.mxu0 0
        %2111 = vmatpush1.bf16.msra.mxu0 0
        %2112 = vmatprep.subr.bf16.mxu0 0
        %2113 = vmatpush1.bf16.msra.mxu0 0
        %2114 = vmatprep.subr.bf16.mxu0 0
        %2115 = vmatpush1.bf16.msra.mxu0 0
        %2116 = vmatprep.subr.bf16.mxu0 0
        %2117 = vmatpush1.bf16.msra.mxu0 0
        %2118 = vmatprep.subr.bf16.mxu0 0
        %2119 = vmatpush1.bf16.msra.mxu0 0
        %2120 = vmatprep.subr.bf16.mxu0 0
        %2121 = vmatpush1.bf16.msra.mxu0 0
        %2122 = vmatprep.subr.bf16.mxu0 0
        %2123 = vmatpush1.bf16.msra.mxu0 0
        %2124 = vmatprep.subr.bf16.mxu0 0
        %2125 = vmatpush1.bf16.msra.mxu0 0
        %2126 = vmatprep.subr.bf16.mxu0 0
        %2127 = vmatpush1.bf16.msra.mxu0 0
        %2128 = vmatprep.mubr.bf16.mxu0 0
        %2129 = vmatmul.mubr.bf16.gmra.mrb[0].mxu0 %v2045
        %v2130 = vpop.f32.mrb[0].mxu0
        %v2131 = vadd.f32 %v2026, %v2130
        %v2132 = vpop.f32.mrb[0].mxu0
        %v2133 = vpop.f32.mrb[0].mxu0
        %v2134 = vadd.f32 %v2026, %v2133
        %v2135 = vpop.f32.mrb[0].mxu0
        %2136 = vmatprep.mubr.bf16.mxu0 0
        %2137 = vmatmul.mubr.bf16.gmra.mrb[0].mxu0 %v2048
        %v2138 = vpop.f32.mrb[0].mxu0
        %v2139 = vadd.f32 %v2026, %v2138
        %v2140 = vpop.f32.mrb[0].mxu0
        %v2141 = vpop.f32.mrb[0].mxu0
        %v2142 = vadd.f32 %v2026, %v2141
        %v2143 = vpop.f32.mrb[0].mxu0
        %2144 = vmatprep.mubr.bf16.mxu0 0
        %2145 = vmatmul.mubr.bf16.gmra.mrb[0].mxu0 %v2051
        %v2146 = vpop.f32.mrb[0].mxu0
        %v2147 = vadd.f32 %v2026, %v2146
        %v2148 = vpop.f32.mrb[0].mxu0
        %v2149 = vpop.f32.mrb[0].mxu0
        %v2150 = vadd.f32 %v2026, %v2149
        %v2151 = vpop.f32.mrb[0].mxu0
        %2152 = vmatprep.mubr.bf16.mxu0 0
        %2153 = vmatmul.mubr.bf16.gmra.mrb[0].mxu0 %v2054
        %v2154 = vpop.f32.mrb[0].mxu0
        %v2155 = vadd.f32 %v2026, %v2154
        %v2156 = vpop.f32.mrb[0].mxu0
        %v2157 = vpop.f32.mrb[0].mxu0
        %v2158 = vadd.f32 %v2026, %v2157
        %v2159 = vpop.f32.mrb[0].mxu0
        %2160 = vmatprep.mubr.bf16.mxu0 0
        %2161 = vmatmul.mubr.bf16.gmra.mrb[0].mxu0 %v2057
        %v2162 = vpop.f32.mrb[0].mxu0
        %v2163 = vadd.f32 %v2026, %v2162
        %v2164 = vpop.f32.mrb[0].mxu0
        %v2165 = vpop.f32.mrb[0].mxu0
        %v2166 = vadd.f32 %v2026, %v2165
        %v2167 = vpop.f32.mrb[0].mxu0
        %2168 = vmatprep.mubr.bf16.mxu0 0
        %2169 = vmatmul.mubr.bf16.gmra.mrb[0].mxu0 %v2060
        %v2170 = vpop.f32.mrb[0].mxu0
        %v2171 = vadd.f32 %v2026, %v2170
        %v2172 = vpop.f32.mrb[0].mxu0
        %v2173 = vpop.f32.mrb[0].mxu0
        %v2174 = vadd.f32 %v2026, %v2173
        %v2175 = vpop.f32.mrb[0].mxu0
        %2176 = vmatprep.mubr.bf16.mxu0 0
        %2177 = vmatmul.mubr.bf16.gmra.mrb[0].mxu0 %v2063
        %v2178 = vpop.f32.mrb[0].mxu0
        %v2179 = vadd.f32 %v2026, %v2178
        %v2180 = vpop.f32.mrb[0].mxu0
        %v2181 = vpop.f32.mrb[0].mxu0
        %v2182 = vadd.f32 %v2026, %v2181
        %v2183 = vpop.f32.mrb[0].mxu0
        %2184 = vmatprep.mubr.bf16.mxu0 0
        %2185 = vmatmul.mubr.bf16.gmra.mrb[0].mxu0 %v2066
        %v2186 = vpop.f32.mrb[0].mxu0
        %v2187 = vadd.f32 %v2026, %v2186
        %v2188 = vpop.f32.mrb[0].mxu0
        %v2189 = vpop.f32.mrb[0].mxu0
        %v2190 = vadd.f32 %v2026, %v2189
        %v2191 = vpop.f32.mrb[0].mxu0
        %2192 = vmatprep.mubr.bf16.mxu0 0
        %2193 = vmatmul.mubr.bf16.gmra.mrb[0].mxu0 %v2069
        %v2194 = vpop.f32.mrb[0].mxu0
        %v2195 = vadd.f32 %v2026, %v2194
        %v2196 = vpop.f32.mrb[0].mxu0
        %v2197 = vpop.f32.mrb[0].mxu0
        %v2198 = vadd.f32 %v2026, %v2197
        %v2199 = vpop.f32.mrb[0].mxu0
        %2200 = vmatprep.mubr.bf16.mxu0 0
        %2201 = vmatmul.mubr.bf16.gmra.mrb[0].mxu0 %v2072
        %v2202 = vpop.f32.mrb[0].mxu0
        %v2203 = vadd.f32 %v2026, %v2202
        %v2204 = vpop.f32.mrb[0].mxu0
        %v2205 = vpop.f32.mrb[0].mxu0
        %v2206 = vadd.f32 %v2026, %v2205
        %v2207 = vpop.f32.mrb[0].mxu0
        %2208 = vmatprep.mubr.bf16.mxu0 0
        %2209 = vmatmul.mubr.bf16.gmra.mrb[0].mxu0 %v2075
        %v2210 = vpop.f32.mrb[0].mxu0
        %v2211 = vadd.f32 %v2026, %v2210
        %v2212 = vpop.f32.mrb[0].mxu0
        %v2213 = vpop.f32.mrb[0].mxu0
        %v2214 = vadd.f32 %v2026, %v2213
        %v2215 = vpop.f32.mrb[0].mxu0
        %2216 = vmatprep.mubr.bf16.mxu0 0
        %2217 = vmatmul.mubr.bf16.gmra.mrb[0].mxu0 %v2078
        %v2218 = vpop.f32.mrb[0].mxu0
        %v2219 = vadd.f32 %v2026, %v2218
        %v2220 = vpop.f32.mrb[0].mxu0
        %v2221 = vpop.f32.mrb[0].mxu0
        %v2222 = vadd.f32 %v2026, %v2221
        %v2223 = vpop.f32.mrb[0].mxu0
        %2224 = vmatprep.mubr.bf16.mxu0 0
        %2225 = vmatmul.mubr.bf16.gmra.mrb[0].mxu0 %v2081
        %v2226 = vpop.f32.mrb[0].mxu0
        %v2227 = vadd.f32 %v2026, %v2226
        %v2228 = vpop.f32.mrb[0].mxu0
        %v2229 = vpop.f32.mrb[0].mxu0
        %v2230 = vadd.f32 %v2026, %v2229
        %v2231 = vpop.f32.mrb[0].mxu0
        %2232 = vmatprep.mubr.bf16.mxu0 0
        %2233 = vmatmul.mubr.bf16.gmra.mrb[0].mxu0 %v2084
        %v2234 = vpop.f32.mrb[0].mxu0
        %v2235 = vadd.f32 %v2026, %v2234
        %v2236 = vpop.f32.mrb[0].mxu0
        %v2237 = vpop.f32.mrb[0].mxu0
        %v2238 = vadd.f32 %v2026, %v2237
        %v2239 = vpop.f32.mrb[0].mxu0
        %2240 = vmatprep.mubr.bf16.mxu0 0
        %2241 = vmatmul.mubr.bf16.gmra.mrb[0].mxu0 %v2087
        %v2242 = vpop.f32.mrb[0].mxu0
        %v2243 = vadd.f32 %v2026, %v2242
        %v2244 = vpop.f32.mrb[0].mxu0
        %v2245 = vpop.f32.mrb[0].mxu0
        %v2246 = vadd.f32 %v2026, %v2245
        %v2247 = vpop.f32.mrb[0].mxu0
        %2248 = vmatprep.mubr.bf16.mxu0 0
        %2249 = vmatmul.mubr.bf16.gmra.mrb[0].mxu0 %v2090
        %v2250 = vpop.f32.mrb[0].mxu0
        %v2251 = vadd.f32 %v2026, %v2250
        %v2252 = vpop.f32.mrb[0].mxu0
        %v2253 = vpop.f32.mrb[0].mxu0
        %v2254 = vadd.f32 %v2026, %v2253
        %v2255 = vpop.f32.mrb[0].mxu0
        %2256 = vdwg.mxu0
        %v2257 = vmax.f32 %v2131, 0.0
        %v2258 = vmax.f32 %v2134, 0.0
        %v2259 = vmax.f32 %v2139, 0.0
        %v2260 = vmax.f32 %v2142, 0.0
        %v2261 = vmax.f32 %v2147, 0.0
        %v2262 = vmax.f32 %v2150, 0.0
        %v2263 = vmax.f32 %v2155, 0.0
        %v2264 = vmax.f32 %v2158, 0.0
        %v2265 = vmax.f32 %v2163, 0.0
        %v2266 = vmax.f32 %v2166, 0.0
        %v2267 = vmax.f32 %v2171, 0.0
        %v2268 = vmax.f32 %v2174, 0.0
        %v2269 = vmax.f32 %v2179, 0.0
        %v2270 = vmax.f32 %v2182, 0.0
        %v2271 = vmax.f32 %v2187, 0.0
        %v2272 = vmax.f32 %v2190, 0.0
        %v2273 = vmax.f32 %v2195, 0.0
        %v2274 = vmax.f32 %v2198, 0.0
        %v2275 = vmax.f32 %v2203, 0.0
        %v2276 = vmax.f32 %v2206, 0.0
        %v2277 = vmax.f32 %v2211, 0.0
        %v2278 = vmax.f32 %v2214, 0.0
        %v2279 = vmax.f32 %v2219, 0.0
        %v2280 = vmax.f32 %v2222, 0.0
        %v2281 = vmax.f32 %v2227, 0.0
        %v2282 = vmax.f32 %v2230, 0.0
        %v2283 = vmax.f32 %v2235, 0.0
        %v2284 = vmax.f32 %v2238, 0.0
        %v2285 = vmax.f32 %v2243, 0.0
        %v2286 = vmax.f32 %v2246, 0.0
        %v2287 = vmax.f32 %v2251, 0.0
        %v2288 = vmax.f32 %v2254, 0.0
        %2289 = vst [vmem:[%s177] sm:$0xff] %v2257
        %2290 = vst [vmem:[%s177 + $0x8] sm:$0xff] %v2258
        %2291 = vst [vmem:[%s177 + $0x10] sm:$0xff] %v2259
        %2292 = vst [vmem:[%s177 + $0x18] sm:$0xff] %v2260
        %2293 = vst [vmem:[%s177 + $0x20] sm:$0xff] %v2261
        %2294 = vst [vmem:[%s177 + $0x28] sm:$0xff] %v2262
        %2295 = vst [vmem:[%s177 + $0x30] sm:$0xff] %v2263
        %2296 = vst [vmem:[%s177 + $0x38] sm:$0xff] %v2264
        %2297 = vst [vmem:[%s177 + $0x40] sm:$0xff] %v2265
        %2298 = vst [vmem:[%s177 + $0x48] sm:$0xff] %v2266
        %2299 = vst [vmem:[%s177 + $0x50] sm:$0xff] %v2267
        %2300 = vst [vmem:[%s177 + $0x58] sm:$0xff] %v2268
        %2301 = vst [vmem:[%s177 + $0x60] sm:$0xff] %v2269
        %2302 = vst [vmem:[%s177 + $0x68] sm:$0xff] %v2270
        %2303 = vst [vmem:[%s177 + $0x70] sm:$0xff] %v2271
        %2304 = vst [vmem:[%s177 + $0x78] sm:$0xff] %v2272
        %2305 = vst [vmem:[%s177 + $0x80] sm:$0xff] %v2273
        %2306 = vst [vmem:[%s177 + $0x88] sm:$0xff] %v2274
        %2307 = vst [vmem:[%s177 + $0x90] sm:$0xff] %v2275
        %2308 = vst [vmem:[%s177 + $0x98] sm:$0xff] %v2276
        %2309 = vst [vmem:[%s177 + $0xa0] sm:$0xff] %v2277
        %2310 = vst [vmem:[%s177 + $0xa8] sm:$0xff] %v2278
        %2311 = vst [vmem:[%s177 + $0xb0] sm:$0xff] %v2279
        %2312 = vst [vmem:[%s177 + $0xb8] sm:$0xff] %v2280
        %2313 = vst [vmem:[%s177 + $0xc0] sm:$0xff] %v2281
        %2314 = vst [vmem:[%s177 + $0xc8] sm:$0xff] %v2282
        %2315 = vst [vmem:[%s177 + $0xd0] sm:$0xff] %v2283
        %2316 = vst [vmem:[%s177 + $0xd8] sm:$0xff] %v2284
        %2317 = vst [vmem:[%s177 + $0xe0] sm:$0xff] %v2285
        %2318 = vst [vmem:[%s177 + $0xe8] sm:$0xff] %v2286
        %2319 = vst [vmem:[%s177 + $0xf0] sm:$0xff] %v2287
        %2320 = vst [vmem:[%s177 + $0xf8] sm:$0xff] %v2288
        %s2321 = sand.u32 %s107, 1
        %s2322 = scalar_lea.sflag [#allocation4], %s2321
        %s2323 = sand.u32 %s107, 1
        %s2324 = smul.addr %s2323, 256
        %s2325 = scalar_lea.vmem [#allocation3], %s2324
        // Predicated region
        $region33: #{tpu_custom_call.1} parent=31 // pred_check
          %p2326 = pneg %p117
        $region34: #{tpu_custom_call.1} parent=31 // pred_check_branch
          %2328 = sbr.rel (%p2326) target = $region36
        $region35: #{tpu_custom_call.1} parent=31 // pred_region
          %s2329 = smul.u32 32, %s22
          %s2331 = ssub.s32 4096, 4096
          %2332 = vsyncadd %s2322, %s2331
          %s2333 = smul.addr %s21, 32
          %s2334 = sadd.s32 %s2329, %s2333
          %s2335 = smul.addr %s2334, 128
          %s2336 = scalar_lea.hbm %s3, %s2335
          %s2337 = sshll.u32 %s2325, 4
          %s2338 = int_to_ptr.vmem [resolvable:$true] %s2337
          %2343 = dma.vmem_to_hbm [thread:$0]  %s2338, 4096, %s2336, %s2322, 128, 128, 8
        $region36: #{tpu_custom_call.1} parent=31 // pred_fallthru
          _
      $region32: #{tpu_custom_call.1} parent=5 // pred_fallthru
        _
      %p2344 = scmp.le.s32.totalorder 2, %s12
      // Predicated region
      $region37: #{tpu_custom_call.1} parent=5 // pred_check
        %p2345 = pneg %p2344
      $region38: #{tpu_custom_call.1} parent=5 // pred_check_branch
        %2347 = sbr.rel (%p2345) target = $region40
      $region39: #{tpu_custom_call.1} parent=5 // pred_region
        %s2348 = ssub.s32 %s12, 2
        // Predicated region
        $region41: #{tpu_custom_call.1} parent=39 // pred_check
          %p2349 = pneg %p123
        $region42: #{tpu_custom_call.1} parent=39 // pred_check_branch
          %2351 = sbr.rel (%p2349) target = $region44
        $region43: #{tpu_custom_call.1} parent=39 // pred_region
          %s2352 = sand.u32 %s108, 1
          %s2353 = scalar_lea.sflag [#allocation4], %s2352
          %s2354 = sand.u32 %s108, 1
          %s2355 = smul.addr %s2354, 256
          %s2356 = scalar_lea.vmem [#allocation3], %s2355
          %2357 = dma.done %s2353, 4096
        $region44: #{tpu_custom_call.1} parent=39 // pred_fallthru
          _
      $region40: #{tpu_custom_call.1} parent=5 // pred_fallthru
        _
    $region6: #{tpu_custom_call.1} parent=1 // loop_footer
      %s16 = sadd.s32 1, %s12
    $region7: #{tpu_custom_call.1} parent=1 // loop_footer_branch
      %11 = sbr.rel target = $region3
    $region8: #{tpu_custom_call.1} parent=1 // loop_exit
      _
    %2358 = vsyncpa [#allocation4], 1
    %s2359 = scalar_lea.sflag [#allocation4], 1
    %2360 = vsyncpa %s2359, 1

</llo_original>
